<compile_context>
chip_gen: v6e
topology: v6e:2x2x1
jax: 0.10.0
libtpu: 0.0.40
codegen_flags: <defaults>
</compile_context>

<pallas_src>
import functools

import jax
import jax.numpy as jnp
import numpy as np
from jax.experimental import pallas as pl
from jax.experimental.pallas import tpu as pltpu


# ----------------------------------------------------------------------------
# Pallas kernel: embedding_h -> single-layer LSTM (batch_first) -> fc -> softmax
# One grid step processes one batch tile of b_tile rows.
# ----------------------------------------------------------------------------
def _predictor_lstm_kernel(
    x_h_ref,       # [Bt, 6]       f32   first 6 features (batch tile)
    x_seq_ref,     # [T*Bt, F]     bf16  time-major flattened sequence tile
    w_emb_ref,     # [6, H]        f32   embedding_h weight (transposed)
    b_emb_ref,     # [1, H]        f32
    w_ih_ref,      # [F, 4H]       bf16  fused input-hidden weights (i,f,g,o)
    w_hh_ref,      # [H, 4H]       bf16  fused hidden-hidden weights (i,f,g,o)
    b_g_ref,       # [1, 4H]       f32   b_ih + b_hh, fused gate order i,f,g,o
    w_fcd_ref,     # [H, 1]        f32   fc weight col1 - col0
    b_fcd_ref,     # [1, 1]        f32   fc bias  b1 - b0
    out_ref,       # [Bt, 1]       f32   softmax(fc(h_T))[:, -1]
):
    b_tile = x_h_ref.shape[0]
    hidden = w_emb_ref.shape[1]
    timestep = x_seq_ref.shape[0] // b_tile

    # h0 = embedding_h(x[:, 0:6]);  c0 = 0.  Register-resident carries.
    h = (
        jnp.dot(x_h_ref[...], w_emb_ref[...], preferred_element_type=jnp.float32)
        + b_emb_ref[...]
    )
    c = jnp.zeros_like(h)

    # Hoisted input projection with the fused gate bias folded in ONCE
    # (single [1,4H]->[T*Bt,4H] broadcast + add, off the serial chain):
    #   [T*Bt, F] (bf16) @ [F, 4H] (bf16) -> f32 accumulation, + b_g.
    x_proj = (
        jnp.dot(x_seq_ref[...], w_ih_ref[...], preferred_element_type=jnp.float32)
        + b_g_ref[...]
    )

    # Loop-invariant recurrent weights.
    w_hh = w_hh_ref[...]   # [H, 4H] bf16

    # Hoisted lane mask / pre-scale so all four gate activations cost ONE
    # full-vreg tanh per step:
    #   sigmoid(x) = 0.5 * tanh(0.5 * x) + 0.5
    # i/f/o lanes are pre-scaled by 0.5, g lanes stay at 1.0; a single select
    # after the tanh applies the sigmoid affine on the i/f/o lanes only.
    lane = jax.lax.broadcasted_iota(jnp.int32, (b_tile, 4 * hidden), 1)
    is_g = jnp.logical_and(lane >= 2 * hidden, lane < 3 * hidden)
    pre_scale = jnp.where(is_g, 1.0, 0.5).astype(jnp.float32)

    # Fully unrolled recurrence; per step: one [Bt,H]x[H,4H] MXU matmul and
    # two EUP pushes (gate tanh + cell tanh).
    for t in range(timestep):
        gates = x_proj[t * b_tile:(t + 1) * b_tile, :] + jnp.dot(
            h.astype(w_hh.dtype), w_hh, preferred_element_type=jnp.float32
        )  # [Bt, 4H]
        th = jnp.tanh(gates * pre_scale)            # 1 EUP push, full vreg
        act = jnp.where(is_g, th, 0.5 * th + 0.5)   # VPU fixup (sigmoid lanes)
        i_g = act[:, 0 * hidden:1 * hidden]
        f_g = act[:, 1 * hidden:2 * hidden]
        g_g = act[:, 2 * hidden:3 * hidden]
        o_g = act[:, 3 * hidden:4 * hidden]
        c = f_g * c + i_g * g_g
        h = o_g * jnp.tanh(c)                       # 1 EUP push

    # fc + softmax over 2 classes, keep class 1:
    #   softmax([l0, l1])[1] == sigmoid(l1 - l0) == 0.5*tanh(0.5*(l1-l0))+0.5
    logit_diff = (
        jnp.dot(h, w_fcd_ref[...], preferred_element_type=jnp.float32)
        + b_fcd_ref[...]
    )
    out_ref[...] = 0.5 * jnp.tanh(0.5 * logit_diff) + 0.5


# ----------------------------------------------------------------------------
# Wrapper (slicing / reshape / transpose / dtype casts stay in plain JAX)
# ----------------------------------------------------------------------------
@functools.partial(jax.jit, static_argnames=("timestep", "b_tile"))
def predictor_lstm_forward(x, params, *, timestep, b_tile=8):
    batch, input_dim = x.shape
    feat = (input_dim - 6) // timestep
    assert batch % b_tile == 0, "batch must be a multiple of b_tile"
    n_tiles = batch // b_tile
    hidden = params["w_emb"].shape[1]

    x_h = x[:, 0:6]
    # Per-batch-tile, time-major slabs: [n_tiles, T*b_tile, F], row
    # (t * b_tile + b) of tile i holds sample (i*b_tile + b) at time step t.
    x_seq = (
        x[:, 6:]
        .reshape(n_tiles, b_tile, timestep, feat)
        .transpose(0, 2, 1, 3)
        .reshape(n_tiles, timestep * b_tile, feat)
        .astype(jnp.bfloat16)
    )

    def full_spec(shape):
        return pl.BlockSpec(shape, lambda i, _s=shape: (0,) * len(_s))

    out = pl.pallas_call(
        _predictor_lstm_kernel,
        out_shape=jax.ShapeDtypeStruct((batch, 1), jnp.float32),
        grid=(n_tiles,),
        in_specs=[
            pl.BlockSpec((b_tile, 6), lambda i: (i, 0)),                      # x_h
            pl.BlockSpec((None, timestep * b_tile, feat), lambda i: (i, 0, 0)),  # x_seq
            full_spec((6, hidden)),            # w_emb
            full_spec((1, hidden)),            # b_emb
            full_spec((feat, 4 * hidden)),     # w_ih fused
            full_spec((hidden, 4 * hidden)),   # w_hh fused
            full_spec((1, 4 * hidden)),        # b_g fused
            full_spec((hidden, 1)),            # w_fc_diff
            full_spec((1, 1)),                 # b_fc_diff
        ],
        out_specs=pl.BlockSpec((b_tile, 1), lambda i: (i, 0)),
        compiler_params=pltpu.CompilerParams(
            dimension_semantics=("parallel",),   # shard batch tiles across TCs (v7x)
        ),
    )(
        x_h,
        x_seq,
        params["w_emb"],
        params["b_emb"],
        params["w_ih_f"],
        params["w_hh_f"],
        params["b_g_f"],
        params["w_fc_diff"],
        params["b_fc_diff"],
    )
    return out[:, 0]  # [B]


# ----------------------------------------------------------------------------
# Deterministic parameter init (PyTorch-default-style uniform) + fused packing
# ----------------------------------------------------------------------------
def init_params(key, *, timestep, input_dim, hidden_dim, output_dim=2):
    feat = (input_dim - 6) // timestep
    ks = jax.random.split(key, 8)

    def unif(k, shape, fan_in):
        bound = 1.0 / np.sqrt(fan_in)
        return jax.random.uniform(k, shape, jnp.float32, -bound, bound)

    # embedding_h: Linear(6, H)
    w_emb = unif(ks[0], (6, hidden_dim), 6)               # stored [in, out]
    b_emb = unif(ks[1], (1, hidden_dim), 6)

    # LSTM(feat, H): PyTorch weight_ih [4H, F], weight_hh [4H, H], biases [4H],
    # gate order i,f,g,o.  Fused/transposed to [F, 4H] / [H, 4H] / [1, 4H].
    w_ih = unif(ks[2], (4 * hidden_dim, feat), hidden_dim)
    w_hh = unif(ks[3], (4 * hidden_dim, hidden_dim), hidden_dim)
    b_ih = unif(ks[4], (4 * hidden_dim,), hidden_dim)
    b_hh = unif(ks[5], (4 * hidden_dim,), hidden_dim)
    w_ih_f = jnp.transpose(w_ih).astype(jnp.bfloat16)      # [F, 4H]  MXU operand
    w_hh_f = jnp.transpose(w_hh).astype(jnp.bfloat16)      # [H, 4H]  MXU operand
    b_g_f = (b_ih + b_hh).reshape(1, 4 * hidden_dim)       # f32

    # fc: Linear(H, output_dim)
    w_fc = unif(ks[6], (hidden_dim, output_dim), hidden_dim)  # stored [in, out]
    b_fc = unif(ks[7], (1, output_dim), hidden_dim)
    # softmax(.)[:, -1] over 2 classes == sigmoid of the logit difference.
    w_fc_diff = (w_fc[:, 1] - w_fc[:, 0]).reshape(hidden_dim, 1)
    b_fc_diff = (b_fc[:, 1] - b_fc[:, 0]).reshape(1, 1)

    return {
        "w_emb": w_emb, "b_emb": b_emb,
        "w_ih_f": w_ih_f, "w_hh_f": w_hh_f, "b_g_f": b_g_f,
        "w_fc": w_fc, "b_fc": b_fc,                 # full fc (reference only)
        "w_fc_diff": w_fc_diff, "b_fc_diff": b_fc_diff,
    }


# ----------------------------------------------------------------------------
# Pure-JAX reference (mirrors the PyTorch forward; f32 gate math, same
# bf16-rounded LSTM weights AND bf16-rounded x_seq as the kernel, full
# softmax epilogue)
# ----------------------------------------------------------------------------
def reference_forward(x, params, *, timestep):
    batch, input_dim = x.shape
    feat = (input_dim - 6) // timestep
    hidden = params["w_emb"].shape[1]

    x_h = x[:, 0:6]
    x_seq = (
        x[:, 6:].reshape(batch, timestep, feat)
        .astype(jnp.bfloat16).astype(jnp.float32)     # match kernel's input quant
    )

    w_ih = params["w_ih_f"].astype(jnp.float32)   # [F, 4H]
    w_hh = params["w_hh_f"].astype(jnp.float32)   # [H, 4H]
    b_g = params["b_g_f"]

    h = x_h @ params["w_emb"] + params["b_emb"]
    c = jnp.zeros_like(h)
    for t in range(timestep):
        gates = x_seq[:, t, :] @ w_ih + h @ w_hh + b_g
        i_g = jax.nn.sigmoid(gates[:, 0 * hidden:1 * hidden])
        f_g = jax.nn.sigmoid(gates[:, 1 * hidden:2 * hidden])
        g_g = jnp.tanh(gates[:, 2 * hidden:3 * hidden])
        o_g = jax.nn.sigmoid(gates[:, 3 * hidden:4 * hidden])
        c = f_g * c + i_g * g_g
        h = o_g * jnp.tanh(c)

    logits = h @ params["w_fc"] + params["b_fc"]
    return jax.nn.softmax(logits, axis=1)[:, -1]


# ----------------------------------------------------------------------------
if __name__ == "__main__":
    # Small, module-consistent shapes: batch=16 (2 tiles of 8 -> exercises the
    # parallel batch grid), timestep=8, per-step feat=16, hidden=32 (so fused
    # gate width 4H = 128), output_dim=2.  input_dim = 6 + 8*16 = 134.
    TIMESTEP = 8
    FEAT = 16
    HIDDEN = 32
    BATCH = 16
    B_TILE = 8
    INPUT_DIM = 6 + TIMESTEP * FEAT

    key = jax.random.PRNGKey(0)
    k_x, k_p = jax.random.split(key)
    x = jax.random.normal(k_x, (BATCH, INPUT_DIM), jnp.float32)
    params = init_params(
        k_p, timestep=TIMESTEP, input_dim=INPUT_DIM, hidden_dim=HIDDEN
    )

    out = predictor_lstm_forward(x, params, timestep=TIMESTEP, b_tile=B_TILE)
    out = jax.block_until_ready(out)

    ref = reference_forward(x, params, timestep=TIMESTEP)
    assert out.shape == (BATCH,)
    # Tolerance covers the per-step bf16 rounding of the recurrent state fed
    # to the MXU (weights and x_seq are identically bf16-rounded in both).
    np.testing.assert_allclose(np.asarray(out), np.asarray(ref), atol=5e-3, rtol=5e-3)

    print("KERNEL_OK")
</pallas_src>

<mosaic_0001>
module attributes {stable_mosaic.version = 11 : i64} {
  func.func @_predictor_lstm_kernel(%arg0: i32, %arg1: memref<8x6xf32, #tpu.memory_space<vmem>>, %arg2: memref<1x64x16xbf16, #tpu.memory_space<vmem>>, %arg3: memref<6x32xf32, #tpu.memory_space<vmem>>, %arg4: memref<1x32xf32, #tpu.memory_space<vmem>>, %arg5: memref<16x128xbf16, #tpu.memory_space<vmem>>, %arg6: memref<32x128xbf16, #tpu.memory_space<vmem>>, %arg7: memref<1x128xf32, #tpu.memory_space<vmem>>, %arg8: memref<32x1xf32, #tpu.memory_space<vmem>>, %arg9: memref<1x1xf32, #tpu.memory_space<vmem>>, %arg10: memref<8x1xf32, #tpu.memory_space<vmem>>) attributes {dimension_semantics = [#tpu.dimension_semantics<parallel>], iteration_bounds = array<i64: 2>, scalar_prefetch = 0 : i64, scratch_operands = 0 : i64, tpu.core_type = #tpu.core_type<tc>, window_params = [{transform_indices = @transform_0, window_bounds = array<i64: 8, 6>}, {transform_indices = @transform_1, window_bounds = array<i64: 1, 64, 16>}, {pipeline_mode = #tpu.pipeline_mode<synchronous>, transform_indices = @transform_2, window_bounds = array<i64: 6, 32>}, {pipeline_mode = #tpu.pipeline_mode<synchronous>, transform_indices = @transform_3, window_bounds = array<i64: 1, 32>}, {pipeline_mode = #tpu.pipeline_mode<synchronous>, transform_indices = @transform_4, window_bounds = array<i64: 16, 128>}, {pipeline_mode = #tpu.pipeline_mode<synchronous>, transform_indices = @transform_5, window_bounds = array<i64: 32, 128>}, {pipeline_mode = #tpu.pipeline_mode<synchronous>, transform_indices = @transform_6, window_bounds = array<i64: 1, 128>}, {pipeline_mode = #tpu.pipeline_mode<synchronous>, transform_indices = @transform_7, window_bounds = array<i64: 32, 1>}, {pipeline_mode = #tpu.pipeline_mode<synchronous>, transform_indices = @transform_8, window_bounds = array<i64: 1, 1>}, {transform_indices = @transform_9, window_bounds = array<i64: 8, 1>}]} {
    %c0 = arith.constant 0 : index
    %c0_0 = arith.constant 0 : index
    %0 = vector.load %arg1[%c0, %c0_0] : memref<8x6xf32, #tpu.memory_space<vmem>>, vector<8x6xf32>
    %c0_1 = arith.constant 0 : index
    %c0_2 = arith.constant 0 : index
    %1 = vector.load %arg3[%c0_1, %c0_2] : memref<6x32xf32, #tpu.memory_space<vmem>>, vector<6x32xf32>
    %cst = arith.constant dense<0.000000e+00> : vector<8x32xf32>
    %2 = tpu.matmul %0, %1, %cst {dimension_numbers = #tpu.dot_dimension_numbers<[1], [0], [0], [1], [0, 0, 1, 1], [], []>} : vector<8x6xf32>, vector<6x32xf32>, vector<8x32xf32> -> vector<8x32xf32>
    %c0_3 = arith.constant 0 : index
    %c0_4 = arith.constant 0 : index
    %3 = vector.load %arg4[%c0_3, %c0_4] : memref<1x32xf32, #tpu.memory_space<vmem>>, vector<1x32xf32>
    %4 = vector.broadcast %3 : vector<1x32xf32> to vector<8x32xf32>
    %5 = arith.addf %2, %4 : vector<8x32xf32>
    %cst_5 = arith.constant 0.000000e+00 : f32
    %6 = vector.broadcast %cst_5 : f32 to vector<8x32xf32>
    %c0_6 = arith.constant 0 : index
    %c0_7 = arith.constant 0 : index
    %c0_8 = arith.constant 0 : index
    %7 = vector.load %arg2[%c0_6, %c0_7, %c0_8] : memref<1x64x16xbf16, #tpu.memory_space<vmem>>, vector<1x64x16xbf16>
    %8 = vector.shape_cast %7 : vector<1x64x16xbf16> to vector<64x16xbf16>
    %c0_9 = arith.constant 0 : index
    %c0_10 = arith.constant 0 : index
    %9 = vector.load %arg5[%c0_9, %c0_10] : memref<16x128xbf16, #tpu.memory_space<vmem>>, vector<16x128xbf16>
    %cst_11 = arith.constant dense<0.000000e+00> : vector<64x128xf32>
    %10 = tpu.matmul %8, %9, %cst_11 {dimension_numbers = #tpu.dot_dimension_numbers<[1], [0], [0], [1], [0, 0, 1, 1], [], []>} : vector<64x16xbf16>, vector<16x128xbf16>, vector<64x128xf32> -> vector<64x128xf32>
    %c0_12 = arith.constant 0 : index
    %c0_13 = arith.constant 0 : index
    %11 = vector.load %arg7[%c0_12, %c0_13] : memref<1x128xf32, #tpu.memory_space<vmem>>, vector<1x128xf32>
    %12 = vector.broadcast %11 : vector<1x128xf32> to vector<64x128xf32>
    %13 = arith.addf %10, %12 : vector<64x128xf32>
    %c0_14 = arith.constant 0 : index
    %c0_15 = arith.constant 0 : index
    %14 = vector.load %arg6[%c0_14, %c0_15] : memref<32x128xbf16, #tpu.memory_space<vmem>>, vector<32x128xbf16>
    %15 = tpu.iota {dimensions = array<i32: 1>} : vector<8x128xi32>
    %c64_i32 = arith.constant 64 : i32
    %16 = vector.broadcast %c64_i32 : i32 to vector<8x128xi32>
    %17 = arith.cmpi sge, %15, %16 : vector<8x128xi32>
    %c96_i32 = arith.constant 96 : i32
    %18 = vector.broadcast %c96_i32 : i32 to vector<8x128xi32>
    %19 = arith.cmpi slt, %15, %18 : vector<8x128xi32>
    %20 = arith.andi %17, %19 : vector<8x128xi1>
    %cst_16 = arith.constant 1.000000e+00 : f32
    %cst_17 = arith.constant 5.000000e-01 : f32
    %21 = vector.broadcast %cst_16 : f32 to vector<8x128xf32>
    %22 = vector.broadcast %cst_17 : f32 to vector<8x128xf32>
    %23 = arith.select %20, %21, %22 : vector<8x128xi1>, vector<8x128xf32>
    %24 = vector.extract_strided_slice %13 {offsets = [0, 0], sizes = [8, 128], strides = [1, 1]} : vector<64x128xf32> to vector<8x128xf32>
    %25 = arith.truncf %5 : vector<8x32xf32> to vector<8x32xbf16>
    %cst_18 = arith.constant dense<0.000000e+00> : vector<8x128xf32>
    %26 = tpu.matmul %25, %14, %cst_18 {dimension_numbers = #tpu.dot_dimension_numbers<[1], [0], [0], [1], [0, 0, 1, 1], [], []>} : vector<8x32xbf16>, vector<32x128xbf16>, vector<8x128xf32> -> vector<8x128xf32>
    %27 = arith.addf %24, %26 : vector<8x128xf32>
    %28 = arith.mulf %27, %23 : vector<8x128xf32>
    %29 = math.tanh %28 : vector<8x128xf32>
    %cst_19 = arith.constant 5.000000e-01 : f32
    %30 = vector.broadcast %cst_19 : f32 to vector<8x128xf32>
    %31 = arith.mulf %30, %29 : vector<8x128xf32>
    %cst_20 = arith.constant 5.000000e-01 : f32
    %32 = vector.broadcast %cst_20 : f32 to vector<8x128xf32>
    %33 = arith.addf %31, %32 : vector<8x128xf32>
    %34 = arith.select %20, %29, %33 : vector<8x128xi1>, vector<8x128xf32>
    %35 = vector.extract_strided_slice %34 {offsets = [0, 0], sizes = [8, 32], strides = [1, 1]} : vector<8x128xf32> to vector<8x32xf32>
    %36 = vector.extract_strided_slice %34 {offsets = [0, 32], sizes = [8, 32], strides = [1, 1]} : vector<8x128xf32> to vector<8x32xf32>
    %37 = vector.extract_strided_slice %34 {offsets = [0, 64], sizes = [8, 32], strides = [1, 1]} : vector<8x128xf32> to vector<8x32xf32>
    %38 = vector.extract_strided_slice %34 {offsets = [0, 96], sizes = [8, 32], strides = [1, 1]} : vector<8x128xf32> to vector<8x32xf32>
    %39 = arith.mulf %36, %6 : vector<8x32xf32>
    %40 = arith.mulf %35, %37 : vector<8x32xf32>
    %41 = arith.addf %39, %40 : vector<8x32xf32>
    %42 = math.tanh %41 : vector<8x32xf32>
    %43 = arith.mulf %38, %42 : vector<8x32xf32>
    %44 = vector.extract_strided_slice %13 {offsets = [8, 0], sizes = [8, 128], strides = [1, 1]} : vector<64x128xf32> to vector<8x128xf32>
    %45 = arith.truncf %43 : vector<8x32xf32> to vector<8x32xbf16>
    %cst_21 = arith.constant dense<0.000000e+00> : vector<8x128xf32>
    %46 = tpu.matmul %45, %14, %cst_21 {dimension_numbers = #tpu.dot_dimension_numbers<[1], [0], [0], [1], [0, 0, 1, 1], [], []>} : vector<8x32xbf16>, vector<32x128xbf16>, vector<8x128xf32> -> vector<8x128xf32>
    %47 = arith.addf %44, %46 : vector<8x128xf32>
    %48 = arith.mulf %47, %23 : vector<8x128xf32>
    %49 = math.tanh %48 : vector<8x128xf32>
    %cst_22 = arith.constant 5.000000e-01 : f32
    %50 = vector.broadcast %cst_22 : f32 to vector<8x128xf32>
    %51 = arith.mulf %50, %49 : vector<8x128xf32>
    %cst_23 = arith.constant 5.000000e-01 : f32
    %52 = vector.broadcast %cst_23 : f32 to vector<8x128xf32>
    %53 = arith.addf %51, %52 : vector<8x128xf32>
    %54 = arith.select %20, %49, %53 : vector<8x128xi1>, vector<8x128xf32>
    %55 = vector.extract_strided_slice %54 {offsets = [0, 0], sizes = [8, 32], strides = [1, 1]} : vector<8x128xf32> to vector<8x32xf32>
    %56 = vector.extract_strided_slice %54 {offsets = [0, 32], sizes = [8, 32], strides = [1, 1]} : vector<8x128xf32> to vector<8x32xf32>
    %57 = vector.extract_strided_slice %54 {offsets = [0, 64], sizes = [8, 32], strides = [1, 1]} : vector<8x128xf32> to vector<8x32xf32>
    %58 = vector.extract_strided_slice %54 {offsets = [0, 96], sizes = [8, 32], strides = [1, 1]} : vector<8x128xf32> to vector<8x32xf32>
    %59 = arith.mulf %56, %41 : vector<8x32xf32>
    %60 = arith.mulf %55, %57 : vector<8x32xf32>
    %61 = arith.addf %59, %60 : vector<8x32xf32>
    %62 = math.tanh %61 : vector<8x32xf32>
    %63 = arith.mulf %58, %62 : vector<8x32xf32>
    %64 = vector.extract_strided_slice %13 {offsets = [16, 0], sizes = [8, 128], strides = [1, 1]} : vector<64x128xf32> to vector<8x128xf32>
    %65 = arith.truncf %63 : vector<8x32xf32> to vector<8x32xbf16>
    %cst_24 = arith.constant dense<0.000000e+00> : vector<8x128xf32>
    %66 = tpu.matmul %65, %14, %cst_24 {dimension_numbers = #tpu.dot_dimension_numbers<[1], [0], [0], [1], [0, 0, 1, 1], [], []>} : vector<8x32xbf16>, vector<32x128xbf16>, vector<8x128xf32> -> vector<8x128xf32>
    %67 = arith.addf %64, %66 : vector<8x128xf32>
    %68 = arith.mulf %67, %23 : vector<8x128xf32>
    %69 = math.tanh %68 : vector<8x128xf32>
    %cst_25 = arith.constant 5.000000e-01 : f32
    %70 = vector.broadcast %cst_25 : f32 to vector<8x128xf32>
    %71 = arith.mulf %70, %69 : vector<8x128xf32>
    %cst_26 = arith.constant 5.000000e-01 : f32
    %72 = vector.broadcast %cst_26 : f32 to vector<8x128xf32>
    %73 = arith.addf %71, %72 : vector<8x128xf32>
    %74 = arith.select %20, %69, %73 : vector<8x128xi1>, vector<8x128xf32>
    %75 = vector.extract_strided_slice %74 {offsets = [0, 0], sizes = [8, 32], strides = [1, 1]} : vector<8x128xf32> to vector<8x32xf32>
    %76 = vector.extract_strided_slice %74 {offsets = [0, 32], sizes = [8, 32], strides = [1, 1]} : vector<8x128xf32> to vector<8x32xf32>
    %77 = vector.extract_strided_slice %74 {offsets = [0, 64], sizes = [8, 32], strides = [1, 1]} : vector<8x128xf32> to vector<8x32xf32>
    %78 = vector.extract_strided_slice %74 {offsets = [0, 96], sizes = [8, 32], strides = [1, 1]} : vector<8x128xf32> to vector<8x32xf32>
    %79 = arith.mulf %76, %61 : vector<8x32xf32>
    %80 = arith.mulf %75, %77 : vector<8x32xf32>
    %81 = arith.addf %79, %80 : vector<8x32xf32>
    %82 = math.tanh %81 : vector<8x32xf32>
    %83 = arith.mulf %78, %82 : vector<8x32xf32>
    %84 = vector.extract_strided_slice %13 {offsets = [24, 0], sizes = [8, 128], strides = [1, 1]} : vector<64x128xf32> to vector<8x128xf32>
    %85 = arith.truncf %83 : vector<8x32xf32> to vector<8x32xbf16>
    %cst_27 = arith.constant dense<0.000000e+00> : vector<8x128xf32>
    %86 = tpu.matmul %85, %14, %cst_27 {dimension_numbers = #tpu.dot_dimension_numbers<[1], [0], [0], [1], [0, 0, 1, 1], [], []>} : vector<8x32xbf16>, vector<32x128xbf16>, vector<8x128xf32> -> vector<8x128xf32>
    %87 = arith.addf %84, %86 : vector<8x128xf32>
    %88 = arith.mulf %87, %23 : vector<8x128xf32>
    %89 = math.tanh %88 : vector<8x128xf32>
    %cst_28 = arith.constant 5.000000e-01 : f32
    %90 = vector.broadcast %cst_28 : f32 to vector<8x128xf32>
    %91 = arith.mulf %90, %89 : vector<8x128xf32>
    %cst_29 = arith.constant 5.000000e-01 : f32
    %92 = vector.broadcast %cst_29 : f32 to vector<8x128xf32>
    %93 = arith.addf %91, %92 : vector<8x128xf32>
    %94 = arith.select %20, %89, %93 : vector<8x128xi1>, vector<8x128xf32>
    %95 = vector.extract_strided_slice %94 {offsets = [0, 0], sizes = [8, 32], strides = [1, 1]} : vector<8x128xf32> to vector<8x32xf32>
    %96 = vector.extract_strided_slice %94 {offsets = [0, 32], sizes = [8, 32], strides = [1, 1]} : vector<8x128xf32> to vector<8x32xf32>
    %97 = vector.extract_strided_slice %94 {offsets = [0, 64], sizes = [8, 32], strides = [1, 1]} : vector<8x128xf32> to vector<8x32xf32>
    %98 = vector.extract_strided_slice %94 {offsets = [0, 96], sizes = [8, 32], strides = [1, 1]} : vector<8x128xf32> to vector<8x32xf32>
    %99 = arith.mulf %96, %81 : vector<8x32xf32>
    %100 = arith.mulf %95, %97 : vector<8x32xf32>
    %101 = arith.addf %99, %100 : vector<8x32xf32>
    %102 = math.tanh %101 : vector<8x32xf32>
    %103 = arith.mulf %98, %102 : vector<8x32xf32>
    %104 = vector.extract_strided_slice %13 {offsets = [32, 0], sizes = [8, 128], strides = [1, 1]} : vector<64x128xf32> to vector<8x128xf32>
    %105 = arith.truncf %103 : vector<8x32xf32> to vector<8x32xbf16>
    %cst_30 = arith.constant dense<0.000000e+00> : vector<8x128xf32>
    %106 = tpu.matmul %105, %14, %cst_30 {dimension_numbers = #tpu.dot_dimension_numbers<[1], [0], [0], [1], [0, 0, 1, 1], [], []>} : vector<8x32xbf16>, vector<32x128xbf16>, vector<8x128xf32> -> vector<8x128xf32>
    %107 = arith.addf %104, %106 : vector<8x128xf32>
    %108 = arith.mulf %107, %23 : vector<8x128xf32>
    %109 = math.tanh %108 : vector<8x128xf32>
    %cst_31 = arith.constant 5.000000e-01 : f32
    %110 = vector.broadcast %cst_31 : f32 to vector<8x128xf32>
    %111 = arith.mulf %110, %109 : vector<8x128xf32>
    %cst_32 = arith.constant 5.000000e-01 : f32
    %112 = vector.broadcast %cst_32 : f32 to vector<8x128xf32>
    %113 = arith.addf %111, %112 : vector<8x128xf32>
    %114 = arith.select %20, %109, %113 : vector<8x128xi1>, vector<8x128xf32>
    %115 = vector.extract_strided_slice %114 {offsets = [0, 0], sizes = [8, 32], strides = [1, 1]} : vector<8x128xf32> to vector<8x32xf32>
    %116 = vector.extract_strided_slice %114 {offsets = [0, 32], sizes = [8, 32], strides = [1, 1]} : vector<8x128xf32> to vector<8x32xf32>
    %117 = vector.extract_strided_slice %114 {offsets = [0, 64], sizes = [8, 32], strides = [1, 1]} : vector<8x128xf32> to vector<8x32xf32>
    %118 = vector.extract_strided_slice %114 {offsets = [0, 96], sizes = [8, 32], strides = [1, 1]} : vector<8x128xf32> to vector<8x32xf32>
    %119 = arith.mulf %116, %101 : vector<8x32xf32>
    %120 = arith.mulf %115, %117 : vector<8x32xf32>
    %121 = arith.addf %119, %120 : vector<8x32xf32>
    %122 = math.tanh %121 : vector<8x32xf32>
    %123 = arith.mulf %118, %122 : vector<8x32xf32>
    %124 = vector.extract_strided_slice %13 {offsets = [40, 0], sizes = [8, 128], strides = [1, 1]} : vector<64x128xf32> to vector<8x128xf32>
    %125 = arith.truncf %123 : vector<8x32xf32> to vector<8x32xbf16>
    %cst_33 = arith.constant dense<0.000000e+00> : vector<8x128xf32>
    %126 = tpu.matmul %125, %14, %cst_33 {dimension_numbers = #tpu.dot_dimension_numbers<[1], [0], [0], [1], [0, 0, 1, 1], [], []>} : vector<8x32xbf16>, vector<32x128xbf16>, vector<8x128xf32> -> vector<8x128xf32>
    %127 = arith.addf %124, %126 : vector<8x128xf32>
    %128 = arith.mulf %127, %23 : vector<8x128xf32>
    %129 = math.tanh %128 : vector<8x128xf32>
    %cst_34 = arith.constant 5.000000e-01 : f32
    %130 = vector.broadcast %cst_34 : f32 to vector<8x128xf32>
    %131 = arith.mulf %130, %129 : vector<8x128xf32>
    %cst_35 = arith.constant 5.000000e-01 : f32
    %132 = vector.broadcast %cst_35 : f32 to vector<8x128xf32>
    %133 = arith.addf %131, %132 : vector<8x128xf32>
    %134 = arith.select %20, %129, %133 : vector<8x128xi1>, vector<8x128xf32>
    %135 = vector.extract_strided_slice %134 {offsets = [0, 0], sizes = [8, 32], strides = [1, 1]} : vector<8x128xf32> to vector<8x32xf32>
    %136 = vector.extract_strided_slice %134 {offsets = [0, 32], sizes = [8, 32], strides = [1, 1]} : vector<8x128xf32> to vector<8x32xf32>
    %137 = vector.extract_strided_slice %134 {offsets = [0, 64], sizes = [8, 32], strides = [1, 1]} : vector<8x128xf32> to vector<8x32xf32>
    %138 = vector.extract_strided_slice %134 {offsets = [0, 96], sizes = [8, 32], strides = [1, 1]} : vector<8x128xf32> to vector<8x32xf32>
    %139 = arith.mulf %136, %121 : vector<8x32xf32>
    %140 = arith.mulf %135, %137 : vector<8x32xf32>
    %141 = arith.addf %139, %140 : vector<8x32xf32>
    %142 = math.tanh %141 : vector<8x32xf32>
    %143 = arith.mulf %138, %142 : vector<8x32xf32>
    %144 = vector.extract_strided_slice %13 {offsets = [48, 0], sizes = [8, 128], strides = [1, 1]} : vector<64x128xf32> to vector<8x128xf32>
    %145 = arith.truncf %143 : vector<8x32xf32> to vector<8x32xbf16>
    %cst_36 = arith.constant dense<0.000000e+00> : vector<8x128xf32>
    %146 = tpu.matmul %145, %14, %cst_36 {dimension_numbers = #tpu.dot_dimension_numbers<[1], [0], [0], [1], [0, 0, 1, 1], [], []>} : vector<8x32xbf16>, vector<32x128xbf16>, vector<8x128xf32> -> vector<8x128xf32>
    %147 = arith.addf %144, %146 : vector<8x128xf32>
    %148 = arith.mulf %147, %23 : vector<8x128xf32>
    %149 = math.tanh %148 : vector<8x128xf32>
    %cst_37 = arith.constant 5.000000e-01 : f32
    %150 = vector.broadcast %cst_37 : f32 to vector<8x128xf32>
    %151 = arith.mulf %150, %149 : vector<8x128xf32>
    %cst_38 = arith.constant 5.000000e-01 : f32
    %152 = vector.broadcast %cst_38 : f32 to vector<8x128xf32>
    %153 = arith.addf %151, %152 : vector<8x128xf32>
    %154 = arith.select %20, %149, %153 : vector<8x128xi1>, vector<8x128xf32>
    %155 = vector.extract_strided_slice %154 {offsets = [0, 0], sizes = [8, 32], strides = [1, 1]} : vector<8x128xf32> to vector<8x32xf32>
    %156 = vector.extract_strided_slice %154 {offsets = [0, 32], sizes = [8, 32], strides = [1, 1]} : vector<8x128xf32> to vector<8x32xf32>
    %157 = vector.extract_strided_slice %154 {offsets = [0, 64], sizes = [8, 32], strides = [1, 1]} : vector<8x128xf32> to vector<8x32xf32>
    %158 = vector.extract_strided_slice %154 {offsets = [0, 96], sizes = [8, 32], strides = [1, 1]} : vector<8x128xf32> to vector<8x32xf32>
    %159 = arith.mulf %156, %141 : vector<8x32xf32>
    %160 = arith.mulf %155, %157 : vector<8x32xf32>
    %161 = arith.addf %159, %160 : vector<8x32xf32>
    %162 = math.tanh %161 : vector<8x32xf32>
    %163 = arith.mulf %158, %162 : vector<8x32xf32>
    %164 = vector.extract_strided_slice %13 {offsets = [56, 0], sizes = [8, 128], strides = [1, 1]} : vector<64x128xf32> to vector<8x128xf32>
    %165 = arith.truncf %163 : vector<8x32xf32> to vector<8x32xbf16>
    %cst_39 = arith.constant dense<0.000000e+00> : vector<8x128xf32>
    %166 = tpu.matmul %165, %14, %cst_39 {dimension_numbers = #tpu.dot_dimension_numbers<[1], [0], [0], [1], [0, 0, 1, 1], [], []>} : vector<8x32xbf16>, vector<32x128xbf16>, vector<8x128xf32> -> vector<8x128xf32>
    %167 = arith.addf %164, %166 : vector<8x128xf32>
    %168 = arith.mulf %167, %23 : vector<8x128xf32>
    %169 = math.tanh %168 : vector<8x128xf32>
    %cst_40 = arith.constant 5.000000e-01 : f32
    %170 = vector.broadcast %cst_40 : f32 to vector<8x128xf32>
    %171 = arith.mulf %170, %169 : vector<8x128xf32>
    %cst_41 = arith.constant 5.000000e-01 : f32
    %172 = vector.broadcast %cst_41 : f32 to vector<8x128xf32>
    %173 = arith.addf %171, %172 : vector<8x128xf32>
    %174 = arith.select %20, %169, %173 : vector<8x128xi1>, vector<8x128xf32>
    %175 = vector.extract_strided_slice %174 {offsets = [0, 0], sizes = [8, 32], strides = [1, 1]} : vector<8x128xf32> to vector<8x32xf32>
    %176 = vector.extract_strided_slice %174 {offsets = [0, 32], sizes = [8, 32], strides = [1, 1]} : vector<8x128xf32> to vector<8x32xf32>
    %177 = vector.extract_strided_slice %174 {offsets = [0, 64], sizes = [8, 32], strides = [1, 1]} : vector<8x128xf32> to vector<8x32xf32>
    %178 = vector.extract_strided_slice %174 {offsets = [0, 96], sizes = [8, 32], strides = [1, 1]} : vector<8x128xf32> to vector<8x32xf32>
    %179 = arith.mulf %176, %161 : vector<8x32xf32>
    %180 = arith.mulf %175, %177 : vector<8x32xf32>
    %181 = arith.addf %179, %180 : vector<8x32xf32>
    %182 = math.tanh %181 : vector<8x32xf32>
    %183 = arith.mulf %178, %182 : vector<8x32xf32>
    %c0_42 = arith.constant 0 : index
    %c0_43 = arith.constant 0 : index
    %184 = vector.load %arg8[%c0_42, %c0_43] : memref<32x1xf32, #tpu.memory_space<vmem>>, vector<32x1xf32>
    %cst_44 = arith.constant dense<0.000000e+00> : vector<8x1xf32>
    %185 = tpu.matmul %183, %184, %cst_44 {dimension_numbers = #tpu.dot_dimension_numbers<[1], [0], [0], [1], [0, 0, 1, 1], [], []>} : vector<8x32xf32>, vector<32x1xf32>, vector<8x1xf32> -> vector<8x1xf32>
    %c0_45 = arith.constant 0 : index
    %c0_46 = arith.constant 0 : index
    %186 = vector.load %arg9[%c0_45, %c0_46] : memref<1x1xf32, #tpu.memory_space<vmem>>, vector<1x1xf32>
    %187 = vector.broadcast %186 : vector<1x1xf32> to vector<8x1xf32>
    %188 = arith.addf %185, %187 : vector<8x1xf32>
    %cst_47 = arith.constant 5.000000e-01 : f32
    %189 = vector.broadcast %cst_47 : f32 to vector<8x1xf32>
    %190 = arith.mulf %189, %188 : vector<8x1xf32>
    %191 = math.tanh %190 : vector<8x1xf32>
    %cst_48 = arith.constant 5.000000e-01 : f32
    %192 = vector.broadcast %cst_48 : f32 to vector<8x1xf32>
    %193 = arith.mulf %192, %191 : vector<8x1xf32>
    %cst_49 = arith.constant 5.000000e-01 : f32
    %194 = vector.broadcast %cst_49 : f32 to vector<8x1xf32>
    %195 = arith.addf %193, %194 : vector<8x1xf32>
    %c0_50 = arith.constant 0 : index
    %c0_51 = arith.constant 0 : index
    %196 = vector.load %arg10[%c0_50, %c0_51] : memref<8x1xf32, #tpu.memory_space<vmem>>, vector<8x1xf32>
    tpu.vector_store %arg10[%c0_50, %c0_51], %195 {strides = array<i32>} : memref<8x1xf32, #tpu.memory_space<vmem>>, vector<8x1xf32>,
    return
  }
  func.func @transform_0(%arg0: i32) -> (i32, i32) {
    %c0_i32 = arith.constant 0 : i32
    %c0_i32_0 = arith.constant 0 : i32
    return %arg0, %c0_i32 : i32, i32
  }
  func.func @transform_1(%arg0: i32) -> (i32, i32, i32) {
    %c0_i32 = arith.constant 0 : i32
    %c0_i32_0 = arith.constant 0 : i32
    %c0_i32_1 = arith.constant 0 : i32
    return %arg0, %c0_i32, %c0_i32_0 : i32, i32, i32
  }
  func.func @transform_2(%arg0: i32) -> (i32, i32) {
    %c0_i32 = arith.constant 0 : i32
    %c0_i32_0 = arith.constant 0 : i32
    %c0_i32_1 = arith.constant 0 : i32
    return %c0_i32, %c0_i32_0 : i32, i32
  }
  func.func @transform_3(%arg0: i32) -> (i32, i32) {
    %c0_i32 = arith.constant 0 : i32
    %c0_i32_0 = arith.constant 0 : i32
    %c0_i32_1 = arith.constant 0 : i32
    return %c0_i32, %c0_i32_0 : i32, i32
  }
  func.func @transform_4(%arg0: i32) -> (i32, i32) {
    %c0_i32 = arith.constant 0 : i32
    %c0_i32_0 = arith.constant 0 : i32
    %c0_i32_1 = arith.constant 0 : i32
    return %c0_i32, %c0_i32_0 : i32, i32
  }
  func.func @transform_5(%arg0: i32) -> (i32, i32) {
    %c0_i32 = arith.constant 0 : i32
    %c0_i32_0 = arith.constant 0 : i32
    %c0_i32_1 = arith.constant 0 : i32
    return %c0_i32, %c0_i32_0 : i32, i32
  }
  func.func @transform_6(%arg0: i32) -> (i32, i32) {
    %c0_i32 = arith.constant 0 : i32
    %c0_i32_0 = arith.constant 0 : i32
    %c0_i32_1 = arith.constant 0 : i32
    return %c0_i32, %c0_i32_0 : i32, i32
  }
  func.func @transform_7(%arg0: i32) -> (i32, i32) {
    %c0_i32 = arith.constant 0 : i32
    %c0_i32_0 = arith.constant 0 : i32
    %c0_i32_1 = arith.constant 0 : i32
    return %c0_i32, %c0_i32_0 : i32, i32
  }
  func.func @transform_8(%arg0: i32) -> (i32, i32) {
    %c0_i32 = arith.constant 0 : i32
    %c0_i32_0 = arith.constant 0 : i32
    %c0_i32_1 = arith.constant 0 : i32
    return %c0_i32, %c0_i32_0 : i32, i32
  }
  func.func @transform_9(%arg0: i32) -> (i32, i32) {
    %c0_i32 = arith.constant 0 : i32
    %c0_i32_0 = arith.constant 0 : i32
    return %arg0, %c0_i32 : i32, i32
  }
}

</mosaic_0001>

<llo_original>
// kernel: predictor_lstm_forward.1
$region0: #{predictor_lstm_forward.1}
  #allocation0 [shape = 'u32[]', space=smem, size = 0x4, offset = 0x4, fixed_abs, tag = 'smem constant byte address 0x4 - core index']
  #allocation1 [shape = 'u32[144,128]{1,0:T(1,128)}', space=vmem, size = 0x12000, scoped, tag = 'internal scratch']
  #allocation2 [shape = 'f32[1,1]{1,0:T(1,128)S(1)}', space=vmem, size = 0x200, scoped, tag = 'scoped memory for predictor_lstm_forward.1']
  %s0 = inlined_call_operand.vmem [shape: f32[16,6], index: 0, kind: input, shape index: {}]
  %s1 = inlined_call_operand.vmem [shape: bf16[2,64,16], index: 1, kind: input, shape index: {}]
  %s2 = inlined_call_operand.vmem [shape: f32[6,32], index: 2, kind: input, shape index: {}]
  %s3 = inlined_call_operand.vmem [shape: f32[1,32], index: 3, kind: input, shape index: {}]
  %s4 = inlined_call_operand.vmem [shape: bf16[16,128], index: 4, kind: input, shape index: {}]
  %s5 = inlined_call_operand.vmem [shape: bf16[32,128], index: 5, kind: input, shape index: {}]
  %s6 = inlined_call_operand.vmem [shape: f32[1,128], index: 6, kind: input, shape index: {}]
  %s7 = inlined_call_operand.vmem [shape: f32[32,1], index: 7, kind: input, shape index: {}]
  %s8 = inlined_call_operand.<no memory space> [shape: f32[1,1], index: 8, kind: input, shape index: {}]
  %s9 = inlined_call_operand.vmem [shape: f32[16,1], index: 9, kind: output, shape index: {}]
  %s10 = sld [smem:[#allocation0]]
  $region69: #{predictor_lstm_forward.1} parent=0
    _
  %s12 = ssub.s32 1, %s10
  %s13 = scalar_select 0, %s12, %s10
  %v14 = vstv %s8
  %15 = vst [vmem:[#allocation2] sm:$0x1] %v14
  loop: start=0, step=1, limit=4
  $region2: #{predictor_lstm_forward.1} parent=0 // loop_pre_header
    _
  $region3: #{predictor_lstm_forward.1} parent=0 // loop_header
    %s17 = sphi 0, %s21
    %p18 = scmp.ge.s32.totalorder %s17, 4
    %s27 = sphi 0, %s29
    %s30 = sphi 0, %s27
    %s31 = sphi 0, %s30
    %s47 = sphi 0, %s31
    %s53 = sphi 0, %s55
    %s56 = sphi 0, %s53
    %s57 = sphi 0, %s56
    %s73 = sphi 0, %s57
    %s77 = sphi 0, %s77
    %s79 = sphi 0, %s77
    %s80 = sphi 0, %s79
    %s94 = sphi 0, %s80
    %s98 = sphi 0, %s98
    %s100 = sphi 0, %s98
    %s101 = sphi 0, %s100
    %s115 = sphi 0, %s101
    %s119 = sphi 0, %s119
    %s121 = sphi 0, %s119
    %s122 = sphi 0, %s121
    %s136 = sphi 0, %s122
    %s140 = sphi 0, %s140
    %s142 = sphi 0, %s140
    %s143 = sphi 0, %s142
    %s157 = sphi 0, %s143
    %s161 = sphi 0, %s161
    %s163 = sphi 0, %s161
    %s164 = sphi 0, %s163
    %s178 = sphi 0, %s164
    %s182 = sphi 0, %s182
    %s184 = sphi 0, %s182
    %s185 = sphi 0, %s184
    %s199 = sphi 0, %s185
    %s203 = sphi 0, %s203
    %s205 = sphi 0, %s203
    %s206 = sphi 0, %s205
    %s220 = sphi 0, %s206
    %s226 = sphi 0, %s228
    %s229 = sphi 0, %s226
    %s230 = sphi 0, %s229
    %s246 = sphi 0, %s230
  $region4: #{predictor_lstm_forward.1} parent=0 // loop_header_branch
    %20 = sbr.rel (%p18) target = $region8
  $region5: #{predictor_lstm_forward.1} parent=0 // loop_body
    %s22 = ssub.s32 %s17, 1
    %s23 = ssub.s32 %s17, 2
    %s24 = sadd.s32 %s17, 1
    %s25 = ssub.s32 %s17, %s24
    %p26 = scmp.eq.s32.totalorder %s25, 0
    %s28 = sadd.s32 %s27, 1
    %s29 = scalar_select %p26, %s27, %s28
    %p32 = pneg %p26
    %p33 = scmp.eq.s32.totalorder %s17, 1
    %p34 = por %p32, %p33
    %p35 = scmp.ne.s32.totalorder %s27, %s30
    %p36 = scmp.eq.s32.totalorder %s17, 0
    %p37 = por %p35, %p36
    %p38 = scmp.ne.s32.totalorder %s27, %s30
    %p39 = scmp.eq.s32.totalorder %s22, 1
    %p40 = por %p38, %p39
    %p41 = scmp.ne.s32.totalorder %s30, %s31
    %p42 = scmp.eq.s32.totalorder %s22, 0
    %p43 = por %p41, %p42
    %p44 = scmp.ne.s32.totalorder %s30, %s31
    %p45 = scmp.eq.s32.totalorder %s23, 1
    %p46 = por %p44, %p45
    %p48 = scmp.ne.s32.totalorder %s31, %s47
    %p49 = scmp.eq.s32.totalorder %s23, 0
    %p50 = por %p48, %p49
    %s51 = ssub.s32 %s17, %s24
    %p52 = scmp.eq.s32.totalorder %s51, 0
    %s54 = sadd.s32 %s53, 1
    %s55 = scalar_select %p52, %s53, %s54
    %p58 = pneg %p52
    %p59 = scmp.eq.s32.totalorder %s17, 1
    %p60 = por %p58, %p59
    %p61 = scmp.ne.s32.totalorder %s53, %s56
    %p62 = scmp.eq.s32.totalorder %s17, 0
    %p63 = por %p61, %p62
    %p64 = scmp.ne.s32.totalorder %s53, %s56
    %p65 = scmp.eq.s32.totalorder %s22, 1
    %p66 = por %p64, %p65
    %p67 = scmp.ne.s32.totalorder %s56, %s57
    %p68 = scmp.eq.s32.totalorder %s22, 0
    %p69 = por %p67, %p68
    %p70 = scmp.ne.s32.totalorder %s56, %s57
    %p71 = scmp.eq.s32.totalorder %s23, 1
    %p72 = por %p70, %p71
    %p74 = scmp.ne.s32.totalorder %s57, %s73
    %p75 = scmp.eq.s32.totalorder %s23, 0
    %p76 = por %p74, %p75
    %s78 = sadd.s32 %s77, 1
    %p81 = scmp.eq.s32.totalorder %s17, 1
    %p82 = scmp.ne.s32.totalorder %s77, %s79
    %p83 = scmp.eq.s32.totalorder %s17, 0
    %p84 = por %p82, %p83
    %p85 = scmp.ne.s32.totalorder %s77, %s79
    %p86 = scmp.eq.s32.totalorder %s22, 1
    %p87 = por %p85, %p86
    %p88 = scmp.ne.s32.totalorder %s79, %s80
    %p89 = scmp.eq.s32.totalorder %s22, 0
    %p90 = por %p88, %p89
    %p91 = scmp.ne.s32.totalorder %s79, %s80
    %p92 = scmp.eq.s32.totalorder %s23, 1
    %p93 = por %p91, %p92
    %p95 = scmp.ne.s32.totalorder %s80, %s94
    %p96 = scmp.eq.s32.totalorder %s23, 0
    %p97 = por %p95, %p96
    %s99 = sadd.s32 %s98, 1
    %p102 = scmp.eq.s32.totalorder %s17, 1
    %p103 = scmp.ne.s32.totalorder %s98, %s100
    %p104 = scmp.eq.s32.totalorder %s17, 0
    %p105 = por %p103, %p104
    %p106 = scmp.ne.s32.totalorder %s98, %s100
    %p107 = scmp.eq.s32.totalorder %s22, 1
    %p108 = por %p106, %p107
    %p109 = scmp.ne.s32.totalorder %s100, %s101
    %p110 = scmp.eq.s32.totalorder %s22, 0
    %p111 = por %p109, %p110
    %p112 = scmp.ne.s32.totalorder %s100, %s101
    %p113 = scmp.eq.s32.totalorder %s23, 1
    %p114 = por %p112, %p113
    %p116 = scmp.ne.s32.totalorder %s101, %s115
    %p117 = scmp.eq.s32.totalorder %s23, 0
    %p118 = por %p116, %p117
    %s120 = sadd.s32 %s119, 1
    %p123 = scmp.eq.s32.totalorder %s17, 1
    %p124 = scmp.ne.s32.totalorder %s119, %s121
    %p125 = scmp.eq.s32.totalorder %s17, 0
    %p126 = por %p124, %p125
    %p127 = scmp.ne.s32.totalorder %s119, %s121
    %p128 = scmp.eq.s32.totalorder %s22, 1
    %p129 = por %p127, %p128
    %p130 = scmp.ne.s32.totalorder %s121, %s122
    %p131 = scmp.eq.s32.totalorder %s22, 0
    %p132 = por %p130, %p131
    %p133 = scmp.ne.s32.totalorder %s121, %s122
    %p134 = scmp.eq.s32.totalorder %s23, 1
    %p135 = por %p133, %p134
    %p137 = scmp.ne.s32.totalorder %s122, %s136
    %p138 = scmp.eq.s32.totalorder %s23, 0
    %p139 = por %p137, %p138
    %s141 = sadd.s32 %s140, 1
    %p144 = scmp.eq.s32.totalorder %s17, 1
    %p145 = scmp.ne.s32.totalorder %s140, %s142
    %p146 = scmp.eq.s32.totalorder %s17, 0
    %p147 = por %p145, %p146
    %p148 = scmp.ne.s32.totalorder %s140, %s142
    %p149 = scmp.eq.s32.totalorder %s22, 1
    %p150 = por %p148, %p149
    %p151 = scmp.ne.s32.totalorder %s142, %s143
    %p152 = scmp.eq.s32.totalorder %s22, 0
    %p153 = por %p151, %p152
    %p154 = scmp.ne.s32.totalorder %s142, %s143
    %p155 = scmp.eq.s32.totalorder %s23, 1
    %p156 = por %p154, %p155
    %p158 = scmp.ne.s32.totalorder %s143, %s157
    %p159 = scmp.eq.s32.totalorder %s23, 0
    %p160 = por %p158, %p159
    %s162 = sadd.s32 %s161, 1
    %p165 = scmp.eq.s32.totalorder %s17, 1
    %p166 = scmp.ne.s32.totalorder %s161, %s163
    %p167 = scmp.eq.s32.totalorder %s17, 0
    %p168 = por %p166, %p167
    %p169 = scmp.ne.s32.totalorder %s161, %s163
    %p170 = scmp.eq.s32.totalorder %s22, 1
    %p171 = por %p169, %p170
    %p172 = scmp.ne.s32.totalorder %s163, %s164
    %p173 = scmp.eq.s32.totalorder %s22, 0
    %p174 = por %p172, %p173
    %p175 = scmp.ne.s32.totalorder %s163, %s164
    %p176 = scmp.eq.s32.totalorder %s23, 1
    %p177 = por %p175, %p176
    %p179 = scmp.ne.s32.totalorder %s164, %s178
    %p180 = scmp.eq.s32.totalorder %s23, 0
    %p181 = por %p179, %p180
    %s183 = sadd.s32 %s182, 1
    %p186 = scmp.eq.s32.totalorder %s17, 1
    %p187 = scmp.ne.s32.totalorder %s182, %s184
    %p188 = scmp.eq.s32.totalorder %s17, 0
    %p189 = por %p187, %p188
    %p190 = scmp.ne.s32.totalorder %s182, %s184
    %p191 = scmp.eq.s32.totalorder %s22, 1
    %p192 = por %p190, %p191
    %p193 = scmp.ne.s32.totalorder %s184, %s185
    %p194 = scmp.eq.s32.totalorder %s22, 0
    %p195 = por %p193, %p194
    %p196 = scmp.ne.s32.totalorder %s184, %s185
    %p197 = scmp.eq.s32.totalorder %s23, 1
    %p198 = por %p196, %p197
    %p200 = scmp.ne.s32.totalorder %s185, %s199
    %p201 = scmp.eq.s32.totalorder %s23, 0
    %p202 = por %p200, %p201
    %s204 = sadd.s32 %s203, 1
    %p207 = scmp.eq.s32.totalorder %s17, 1
    %p208 = scmp.ne.s32.totalorder %s203, %s205
    %p209 = scmp.eq.s32.totalorder %s17, 0
    %p210 = por %p208, %p209
    %p211 = scmp.ne.s32.totalorder %s203, %s205
    %p212 = scmp.eq.s32.totalorder %s22, 1
    %p213 = por %p211, %p212
    %p214 = scmp.ne.s32.totalorder %s205, %s206
    %p215 = scmp.eq.s32.totalorder %s22, 0
    %p216 = por %p214, %p215
    %p217 = scmp.ne.s32.totalorder %s205, %s206
    %p218 = scmp.eq.s32.totalorder %s23, 1
    %p219 = por %p217, %p218
    %p221 = scmp.ne.s32.totalorder %s206, %s220
    %p222 = scmp.eq.s32.totalorder %s23, 0
    %p223 = por %p221, %p222
    %s224 = ssub.s32 %s17, %s24
    %p225 = scmp.eq.s32.totalorder %s224, 0
    %s227 = sadd.s32 %s226, 1
    %s228 = scalar_select %p225, %s226, %s227
    %p231 = pneg %p225
    %p232 = scmp.eq.s32.totalorder %s17, 1
    %p233 = por %p231, %p232
    %p234 = scmp.ne.s32.totalorder %s226, %s229
    %p235 = scmp.eq.s32.totalorder %s17, 0
    %p236 = por %p234, %p235
    %p237 = scmp.ne.s32.totalorder %s226, %s229
    %p238 = scmp.eq.s32.totalorder %s22, 1
    %p239 = por %p237, %p238
    %p240 = scmp.ne.s32.totalorder %s229, %s230
    %p241 = scmp.eq.s32.totalorder %s22, 0
    %p242 = por %p240, %p241
    %p243 = scmp.ne.s32.totalorder %s229, %s230
    %p244 = scmp.eq.s32.totalorder %s23, 1
    %p245 = por %p243, %p244
    %p247 = scmp.ne.s32.totalorder %s230, %s246
    %p248 = scmp.eq.s32.totalorder %s23, 0
    %p249 = por %p247, %p248
    %p250 = scmp.le.s32.totalorder 1, %s17
    %p251 = scmp.lt.s32.totalorder %s17, 3
    %p252 = pnand %p250, %p251
    %p253 = pneg %p252
    // Predicated region
    $region9: #{predictor_lstm_forward.1} parent=5 // pred_check
      _
    $region10: #{predictor_lstm_forward.1} parent=5 // pred_check_branch
      %255 = sbr.rel (%p252) target = $region12
    $region11: #{predictor_lstm_forward.1} parent=5 // pred_region
      %s256 = ssub.s32 %s17, 1
      // Predicated region
      $region13: #{predictor_lstm_forward.1} parent=11 // pred_check
        %p257 = pneg %p90
      $region14: #{predictor_lstm_forward.1} parent=11 // pred_check_branch
        %259 = sbr.rel (%p257) target = $region16
      $region15: #{predictor_lstm_forward.1} parent=11 // pred_region
        _
      $region16: #{predictor_lstm_forward.1} parent=11 // pred_fallthru
        _
      // Predicated region
      $region17: #{predictor_lstm_forward.1} parent=11 // pred_check
        %p260 = pneg %p111
      $region18: #{predictor_lstm_forward.1} parent=11 // pred_check_branch
        %262 = sbr.rel (%p260) target = $region20
      $region19: #{predictor_lstm_forward.1} parent=11 // pred_region
        _
      $region20: #{predictor_lstm_forward.1} parent=11 // pred_fallthru
        _
      // Predicated region
      $region21: #{predictor_lstm_forward.1} parent=11 // pred_check
        %p263 = pneg %p132
      $region22: #{predictor_lstm_forward.1} parent=11 // pred_check_branch
        %265 = sbr.rel (%p263) target = $region24
      $region23: #{predictor_lstm_forward.1} parent=11 // pred_region
        _
      $region24: #{predictor_lstm_forward.1} parent=11 // pred_fallthru
        _
      // Predicated region
      $region25: #{predictor_lstm_forward.1} parent=11 // pred_check
        %p266 = pneg %p153
      $region26: #{predictor_lstm_forward.1} parent=11 // pred_check_branch
        %268 = sbr.rel (%p266) target = $region28
      $region27: #{predictor_lstm_forward.1} parent=11 // pred_region
        _
      $region28: #{predictor_lstm_forward.1} parent=11 // pred_fallthru
        _
      // Predicated region
      $region29: #{predictor_lstm_forward.1} parent=11 // pred_check
        %p269 = pneg %p174
      $region30: #{predictor_lstm_forward.1} parent=11 // pred_check_branch
        %271 = sbr.rel (%p269) target = $region32
      $region31: #{predictor_lstm_forward.1} parent=11 // pred_region
        _
      $region32: #{predictor_lstm_forward.1} parent=11 // pred_fallthru
        _
      // Predicated region
      $region33: #{predictor_lstm_forward.1} parent=11 // pred_check
        %p272 = pneg %p195
      $region34: #{predictor_lstm_forward.1} parent=11 // pred_check_branch
        %274 = sbr.rel (%p272) target = $region36
      $region35: #{predictor_lstm_forward.1} parent=11 // pred_region
        _
      $region36: #{predictor_lstm_forward.1} parent=11 // pred_fallthru
        _
      // Predicated region
      $region37: #{predictor_lstm_forward.1} parent=11 // pred_check
        %p275 = pneg %p216
      $region38: #{predictor_lstm_forward.1} parent=11 // pred_check_branch
        %277 = sbr.rel (%p275) target = $region40
      $region39: #{predictor_lstm_forward.1} parent=11 // pred_region
        _
      $region40: #{predictor_lstm_forward.1} parent=11 // pred_fallthru
        _
    $region12: #{predictor_lstm_forward.1} parent=5 // pred_fallthru
      _
    %p278 = scmp.lt.s32.totalorder %s17, 2
    // Predicated region
    $region41: #{predictor_lstm_forward.1} parent=5 // pred_check
      %p279 = pneg %p278
    $region42: #{predictor_lstm_forward.1} parent=5 // pred_check_branch
      %281 = sbr.rel (%p279) target = $region44
    $region43: #{predictor_lstm_forward.1} parent=5 // pred_region
      // Predicated region
      $region45: #{predictor_lstm_forward.1} parent=43 // pred_check
        %p282 = pneg %p37
      $region46: #{predictor_lstm_forward.1} parent=43 // pred_check_branch
        %284 = sbr.rel (%p282) target = $region48
      $region47: #{predictor_lstm_forward.1} parent=43 // pred_region
        %p285 = scmp.lt.s32.totalorder %s17, 1
        %s286 = scalar_select %p285, %s17, 1
        %s287 = smul.addr %s286, 8
        %s288 = scalar_lea.vmem %s0, %s287
      $region48: #{predictor_lstm_forward.1} parent=43 // pred_fallthru
        _
      // Predicated region
      $region49: #{predictor_lstm_forward.1} parent=43 // pred_check
        %p289 = pneg %p63
      $region50: #{predictor_lstm_forward.1} parent=43 // pred_check_branch
        %291 = sbr.rel (%p289) target = $region52
      $region51: #{predictor_lstm_forward.1} parent=43 // pred_region
        %p292 = scmp.lt.s32.totalorder %s17, 1
        %s293 = scalar_select %p292, %s17, 1
        %s294 = smul.addr %s293, 8
        %s295 = smul.addr %s294, 4
        %s296 = scalar_lea.vmem %s1, %s295
      $region52: #{predictor_lstm_forward.1} parent=43 // pred_fallthru
        _
    $region44: #{predictor_lstm_forward.1} parent=5 // pred_fallthru
      _
    %p297 = scmp.le.s32.totalorder 1, %s17
    %p298 = scmp.lt.s32.totalorder %s17, 3
    %p299 = pnand %p297, %p298
    %p300 = pneg %p299
    // Predicated region
    $region53: #{predictor_lstm_forward.1} parent=5 // pred_check
      _
    $region54: #{predictor_lstm_forward.1} parent=5 // pred_check_branch
      %302 = sbr.rel (%p299) target = $region56
    $region55: #{predictor_lstm_forward.1} parent=5 // pred_region
      %s303 = ssub.s32 %s17, 1
      %p304 = scmp.lt.s32.totalorder %s22, 1
      %s305 = scalar_select %p304, %s22, 1
      %s306 = smul.addr %s305, 8
      %s307 = scalar_lea.vmem %s0, %s306
      %p308 = pneg %p43
      %p309 = pneg %p40
      %p310 = scmp.lt.s32.totalorder %s22, 1
      %s311 = scalar_select %p310, %s22, 1
      %s312 = smul.addr %s311, 8
      %s313 = smul.addr %s312, 4
      %s314 = scalar_lea.vmem %s1, %s313
      %p315 = pneg %p69
      %p316 = pneg %p66
      %p317 = pneg %p90
      %p318 = pneg %p87
      %p319 = pneg %p111
      %p320 = pneg %p108
      %p321 = pneg %p132
      %p322 = pneg %p129
      %p323 = pneg %p153
      %p324 = pneg %p150
      %p325 = pneg %p174
      %p326 = pneg %p171
      %p327 = pneg %p195
      %p328 = pneg %p192
      %p329 = pneg %p216
      %p330 = pneg %p213
      %p331 = pneg %p242
      %p332 = pneg %p239
      %p333 = scmp.lt.s32.totalorder %s22, 1
      %s334 = scalar_select %p333, %s22, 1
      %s335 = smul.addr %s334, 8
      %s336 = scalar_lea.vmem %s9, %s335
      %p337 = scmp.lt.s32.totalorder %s22, 1
      %s338 = scalar_select %p337, %s22, 1
      %s339 = smul.addr %s338, 8
      %s340 = scalar_lea.vmem %s0, %s339
      %p341 = scmp.lt.s32.totalorder %s22, 1
      %s342 = scalar_select %p341, %s22, 1
      %s343 = smul.addr %s342, 8
      %s344 = smul.addr %s343, 4
      %s345 = scalar_lea.vmem %s1, %s344
      %p346 = scmp.lt.s32.totalorder %s22, 1
      %s347 = scalar_select %p346, %s22, 1
      %s348 = smul.addr %s347, 8
      %s349 = scalar_lea.vmem %s9, %s348
      %v351 = vld [vmem:[%s340] sm:$0xff]
      %v352 = vld [vmem:[%s2] sm:$0x3f]
      %v353 = vld [vmem:[%s3] sm:$0x1]
      %v355 = vlaneseq
      %v356 = vshrl.u32 %v355, 7
      %v357 = vsub.s32 0, %v356
      %v358 = vrot.slane %v353, %v357
      %vm360 = vcmask 48128
      %v362 = vsel %vm360, %v351, 0
      %vm364 = vcmask 1045504
      %v366 = vsel %vm364, %v352, 0
      %368 = vmatprep.subr.mxu0 0.0
      %369 = vmatpush1.msra.mxu0 0.0
      %370 = vmatprep.subr.mxu0 0.0
      %371 = vmatpush1.msra.mxu0 0.0
      %372 = vmatprep.subr.mxu0 0.0
      %373 = vmatpush1.msra.mxu0 0.0
      %374 = vmatprep.subr.mxu0 0.0
      %375 = vmatpush1.msra.mxu0 0.0
      %376 = vmatprep.subr.mxu0 0.0
      %377 = vmatpush1.msra.mxu0 0.0
      %378 = vmatprep.subr.mxu0 0.0
      %379 = vmatpush1.msra.mxu0 0.0
      %380 = vmatprep.subr.mxu0 0.0
      %381 = vmatpush1.msra.mxu0 0.0
      %382 = vmatprep.subr.mxu0 0.0
      %383 = vmatpush1.msra.mxu0 0.0
      %384 = vmatprep.subr.mxu0 0.0
      %385 = vmatpush1.msra.mxu0 0.0
      %386 = vmatprep.subr.mxu0 0.0
      %387 = vmatpush1.msra.mxu0 0.0
      %388 = vmatprep.subr.mxu0 0.0
      %389 = vmatpush1.msra.mxu0 0.0
      %390 = vmatprep.subr.mxu0 0.0
      %391 = vmatpush1.msra.mxu0 0.0
      %392 = vmatprep.subr.mxu0 0.0
      %393 = vmatpush1.msra.mxu0 0.0
      %394 = vmatprep.subr.mxu0 0.0
      %395 = vmatpush1.msra.mxu0 0.0
      %396 = vmatprep.subr.mxu0 0.0
      %397 = vmatpush1.msra.mxu0 0.0
      %398 = vmatprep.subr.mxu0 0.0
      %399 = vmatpush1.msra.mxu0 %v366
      %400 = vmatprep.subr.mxu0 0.0
      %401 = vmatpush2.msra.mxu0 0.0
      %402 = vmatprep.subr.mxu0 0.0
      %403 = vmatpush2.msra.mxu0 0.0
      %404 = vmatprep.subr.mxu0 0.0
      %405 = vmatpush2.msra.mxu0 0.0
      %406 = vmatprep.subr.mxu0 0.0
      %407 = vmatpush2.msra.mxu0 0.0
      %408 = vmatprep.subr.mxu0 0.0
      %409 = vmatpush2.msra.mxu0 0.0
      %410 = vmatprep.subr.mxu0 0.0
      %411 = vmatpush2.msra.mxu0 0.0
      %412 = vmatprep.subr.mxu0 0.0
      %413 = vmatpush2.msra.mxu0 0.0
      %414 = vmatprep.subr.mxu0 0.0
      %415 = vmatpush2.msra.mxu0 0.0
      %416 = vmatprep.subr.mxu0 0.0
      %417 = vmatpush2.msra.mxu0 0.0
      %418 = vmatprep.subr.mxu0 0.0
      %419 = vmatpush2.msra.mxu0 0.0
      %420 = vmatprep.subr.mxu0 0.0
      %421 = vmatpush2.msra.mxu0 0.0
      %422 = vmatprep.subr.mxu0 0.0
      %423 = vmatpush2.msra.mxu0 0.0
      %424 = vmatprep.subr.mxu0 0.0
      %425 = vmatpush2.msra.mxu0 0.0
      %426 = vmatprep.subr.mxu0 0.0
      %427 = vmatpush2.msra.mxu0 0.0
      %428 = vmatprep.subr.mxu0 0.0
      %429 = vmatpush2.msra.mxu0 0.0
      %430 = vmatprep.subr.mxu0 0.0
      %431 = vmatpush2.msra.mxu0 0.0
      %432 = vmatprep.mubr.f32.mxu0 0.0
      %433 = vmatmul.mubr.f32.gmra.mxu0 %v362
      %v434 = vpop.f32.mrf.mxu0
      %v435 = vadd.f32 %v358, %v434
      %v436 = vpop.f32.mrf.mxu0
      %437 = vdwg.mxu0
      %v438 = vld [vmem:[%s345] sm:$0xf]
      %v439 = vld [vmem:[%s345 + $0x4] sm:$0xf]
      %v440 = vld [vmem:[%s345 + $0x8] sm:$0xf]
      %v441 = vld [vmem:[%s345 + $0xc] sm:$0xf]
      %v442 = vld [vmem:[%s345 + $0x10] sm:$0xf]
      %v443 = vld [vmem:[%s345 + $0x14] sm:$0xf]
      %v444 = vld [vmem:[%s345 + $0x18] sm:$0xf]
      %v445 = vld [vmem:[%s345 + $0x1c] sm:$0xf]
      %v446 = vld [vmem:[%s4] sm:$0xf]
      %v447 = vld [vmem:[%s4 + $0x4] sm:$0xf]
      %v448 = vld [vmem:[%s6] sm:$0x1]
      %v450 = vlaneseq
      %v451 = vshrl.u32 %v450, 7
      %v452 = vsub.s32 0, %v451
      %v453 = vrot.slane %v448, %v452
      %v463 = vunpack.c.l.b16 %v438
      %v464 = vunpack.c.l.b16 %v439
      %v465 = vunpack.c.l.b16 %v440
      %v466 = vunpack.c.l.b16 %v441
      %v467 = vunpack.c.l.b16 %v442
      %v468 = vunpack.c.l.b16 %v443
      %v469 = vunpack.c.l.b16 %v444
      %v470 = vunpack.c.l.b16 %v445
      %v471 = vpack.c.b16 %v464, %v463
      %v472 = vpack.c.b16 %v466, %v465
      %v473 = vpack.c.b16 %v468, %v467
      %v474 = vpack.c.b16 %v470, %v469
      %v477 = vunpack.c.l.b16 %v446
      %v478 = vunpack.c.l.b16 %v447
      %v479 = vpack.c.b16 %v478, %v477
      %vm481 = vcmask 130048
      %v483 = vsel %vm481, %v471, 0
      %v486 = vsel %vm481, %v472, 0
      %v489 = vsel %vm481, %v473, 0
      %v492 = vsel %vm481, %v474, 0
      %494 = vmatprep.subr.bf16.mxu0 0
      %495 = vmatpush1.bf16.msra.mxu0 0
      %496 = vmatprep.subr.bf16.mxu0 0
      %497 = vmatpush1.bf16.msra.mxu0 0
      %498 = vmatprep.subr.bf16.mxu0 0
      %499 = vmatpush1.bf16.msra.mxu0 0
      %500 = vmatprep.subr.bf16.mxu0 0
      %501 = vmatpush1.bf16.msra.mxu0 0
      %502 = vmatprep.subr.bf16.mxu0 0
      %503 = vmatpush1.bf16.msra.mxu0 0
      %504 = vmatprep.subr.bf16.mxu0 0
      %505 = vmatpush1.bf16.msra.mxu0 0
      %506 = vmatprep.subr.bf16.mxu0 0
      %507 = vmatpush1.bf16.msra.mxu0 0
      %508 = vmatprep.subr.bf16.mxu0 0
      %509 = vmatpush1.bf16.msra.mxu0 %v479
      %510 = vmatprep.subr.bf16.mxu0 0
      %511 = vmatpush2.bf16.msra.mxu0 0
      %512 = vmatprep.subr.bf16.mxu0 0
      %513 = vmatpush2.bf16.msra.mxu0 0
      %514 = vmatprep.subr.bf16.mxu0 0
      %515 = vmatpush2.bf16.msra.mxu0 0
      %516 = vmatprep.subr.bf16.mxu0 0
      %517 = vmatpush2.bf16.msra.mxu0 0
      %518 = vmatprep.subr.bf16.mxu0 0
      %519 = vmatpush2.bf16.msra.mxu0 0
      %520 = vmatprep.subr.bf16.mxu0 0
      %521 = vmatpush2.bf16.msra.mxu0 0
      %522 = vmatprep.subr.bf16.mxu0 0
      %523 = vmatpush2.bf16.msra.mxu0 0
      %524 = vmatprep.subr.bf16.mxu0 0
      %525 = vmatpush2.bf16.msra.mxu0 0
      %526 = vmatprep.mubr.bf16.mxu0 0
      %527 = vmatmul.mubr.bf16.gmra.mxu0 %v483
      %v528 = vpop.f32.mrf.mxu0
      %v529 = vadd.f32 %v453, %v528
      %v530 = vpop.f32.mrf.mxu0
      %v531 = vpop.f32.mrf.mxu0
      %v532 = vadd.f32 %v453, %v531
      %v533 = vpop.f32.mrf.mxu0
      %534 = vmatprep.mubr.bf16.mxu0 0
      %535 = vmatmul.mubr.bf16.gmra.mxu0 %v486
      %v536 = vpop.f32.mrf.mxu0
      %v537 = vadd.f32 %v453, %v536
      %v538 = vpop.f32.mrf.mxu0
      %v539 = vpop.f32.mrf.mxu0
      %v540 = vadd.f32 %v453, %v539
      %v541 = vpop.f32.mrf.mxu0
      %542 = vmatprep.mubr.bf16.mxu0 0
      %543 = vmatmul.mubr.bf16.gmra.mxu0 %v489
      %v544 = vpop.f32.mrf.mxu0
      %v545 = vadd.f32 %v453, %v544
      %v546 = vpop.f32.mrf.mxu0
      %v547 = vpop.f32.mrf.mxu0
      %v548 = vadd.f32 %v453, %v547
      %v549 = vpop.f32.mrf.mxu0
      %550 = vmatprep.mubr.bf16.mxu0 0
      %551 = vmatmul.mubr.bf16.gmra.mxu0 %v492
      %v552 = vpop.f32.mrf.mxu0
      %v553 = vadd.f32 %v453, %v552
      %v554 = vpop.f32.mrf.mxu0
      %v555 = vpop.f32.mrf.mxu0
      %v556 = vadd.f32 %v453, %v555
      %v557 = vpop.f32.mrf.mxu0
      %558 = vdwg.mxu0
      %v559 = vld [vmem:[%s5] sm:$0xf]
      %v560 = vld [vmem:[%s5 + $0x4] sm:$0xf]
      %v561 = vld [vmem:[%s5 + $0x8] sm:$0xf]
      %v562 = vld [vmem:[%s5 + $0xc] sm:$0xf]
      %v563 = vlaneseq
      %v564 = vand.u32 %v563, 127
      %vm565 = vcmp.ge.s32.totalorder %v564, 64
      %vm566 = vcmp.lt.s32.totalorder %v564, 96
      %vm567 = vmand %vm565, %vm566
      %v568 = vsel %vm567, 1.0, 0.5
      %v569 = vpack.c.bf16 %v435, %v435
      %v574 = vunpack.c.l.b16 %v559
      %v575 = vunpack.c.l.b16 %v560
      %v576 = vunpack.c.l.b16 %v561
      %v577 = vunpack.c.l.b16 %v562
      %v578 = vpack.c.b16 %v575, %v574
      %v579 = vpack.c.b16 %v577, %v576
      %vm582 = vcmask 261120
      %v584 = vsel %vm582, %v569, 0
      %586 = vmatprep.subr.bf16.mxu0 0
      %587 = vmatpush1.bf16.msra.mxu0 0
      %588 = vmatprep.subr.bf16.mxu0 0
      %589 = vmatpush1.bf16.msra.mxu0 0
      %590 = vmatprep.subr.bf16.mxu0 0
      %591 = vmatpush1.bf16.msra.mxu0 0
      %592 = vmatprep.subr.bf16.mxu0 0
      %593 = vmatpush1.bf16.msra.mxu0 0
      %594 = vmatprep.subr.bf16.mxu0 0
      %595 = vmatpush1.bf16.msra.mxu0 0
      %596 = vmatprep.subr.bf16.mxu0 0
      %597 = vmatpush1.bf16.msra.mxu0 0
      %598 = vmatprep.subr.bf16.mxu0 0
      %599 = vmatpush1.bf16.msra.mxu0 %v579
      %600 = vmatprep.subr.bf16.mxu0 0
      %601 = vmatpush1.bf16.msra.mxu0 %v578
      %602 = vmatprep.subr.bf16.mxu0 0
      %603 = vmatpush2.bf16.msra.mxu0 0
      %604 = vmatprep.subr.bf16.mxu0 0
      %605 = vmatpush2.bf16.msra.mxu0 0
      %606 = vmatprep.subr.bf16.mxu0 0
      %607 = vmatpush2.bf16.msra.mxu0 0
      %608 = vmatprep.subr.bf16.mxu0 0
      %609 = vmatpush2.bf16.msra.mxu0 0
      %610 = vmatprep.subr.bf16.mxu0 0
      %611 = vmatpush2.bf16.msra.mxu0 0
      %612 = vmatprep.subr.bf16.mxu0 0
      %613 = vmatpush2.bf16.msra.mxu0 0
      %614 = vmatprep.subr.bf16.mxu0 0
      %615 = vmatpush2.bf16.msra.mxu0 0
      %616 = vmatprep.subr.bf16.mxu0 0
      %617 = vmatpush2.bf16.msra.mxu0 0
      %618 = vmatprep.mubr.bf16.mxu0 0
      %619 = vmatmul.mubr.bf16.gmra.mxu0 %v584
      %v620 = vpop.f32.mrf.mxu0
      %v621 = vadd.f32 0.0, %v620
      %v622 = vpop.f32.mrf.mxu0
      %v623 = vpop.f32.mrf.mxu0
      %v624 = vpop.f32.mrf.mxu0
      %625 = vdwg.mxu0
      %v626 = vadd.f32 %v529, %v621
      %v627 = vmul.f32 %v626, %v568
      %v628 = vtanh.pop %v627
      %v629 = vmul.f32 %v628, 0.5
      %v630 = vadd.f32 %v629, 0.5
      %v631 = vsel %vm567, %v628, %v630
      %v632 = vmul.f32 %v631, 0.0
      %634 = vrot.lane.b32.xlu0 %v631, 64
      %v635 = vpop.permute.xlu0 %634
      %v637 = vmul.f32 %v631, %v635
      %639 = vrot.lane.b32.xlu0 %v637, 32
      %v640 = vpop.permute.xlu0 %639
      %v642 = vadd.f32 %v632, %v640
      %v643 = vtanh.pop %v642
      %645 = vrot.lane.b32.xlu0 %v643, 64
      %v646 = vpop.permute.xlu0 %645
      %v648 = vmul.f32 %v631, %v646
      %v649 = vpack.c.bf16 %v648, %v648
      %651 = vrot.lane.b32.xlu0 %v649, 32
      %v652 = vpop.permute.xlu0 %651
      %v654 = vsel %vm582, %v652, 0
      %656 = vmatprep.subr.bf16.mxu0 0
      %657 = vmatpush1.bf16.msra.mxu0 0
      %658 = vmatprep.subr.bf16.mxu0 0
      %659 = vmatpush1.bf16.msra.mxu0 0
      %660 = vmatprep.subr.bf16.mxu0 0
      %661 = vmatpush1.bf16.msra.mxu0 0
      %662 = vmatprep.subr.bf16.mxu0 0
      %663 = vmatpush1.bf16.msra.mxu0 0
      %664 = vmatprep.subr.bf16.mxu0 0
      %665 = vmatpush1.bf16.msra.mxu0 0
      %666 = vmatprep.subr.bf16.mxu0 0
      %667 = vmatpush1.bf16.msra.mxu0 0
      %668 = vmatprep.subr.bf16.mxu0 0
      %669 = vmatpush1.bf16.msra.mxu0 %v579
      %670 = vmatprep.subr.bf16.mxu0 0
      %671 = vmatpush1.bf16.msra.mxu0 %v578
      %672 = vmatprep.subr.bf16.mxu0 0
      %673 = vmatpush2.bf16.msra.mxu0 0
      %674 = vmatprep.subr.bf16.mxu0 0
      %675 = vmatpush2.bf16.msra.mxu0 0
      %676 = vmatprep.subr.bf16.mxu0 0
      %677 = vmatpush2.bf16.msra.mxu0 0
      %678 = vmatprep.subr.bf16.mxu0 0
      %679 = vmatpush2.bf16.msra.mxu0 0
      %680 = vmatprep.subr.bf16.mxu0 0
      %681 = vmatpush2.bf16.msra.mxu0 0
      %682 = vmatprep.subr.bf16.mxu0 0
      %683 = vmatpush2.bf16.msra.mxu0 0
      %684 = vmatprep.subr.bf16.mxu0 0
      %685 = vmatpush2.bf16.msra.mxu0 0
      %686 = vmatprep.subr.bf16.mxu0 0
      %687 = vmatpush2.bf16.msra.mxu0 0
      %688 = vmatprep.mubr.bf16.mxu0 0
      %689 = vmatmul.mubr.bf16.gmra.mxu0 %v654
      %v690 = vpop.f32.mrf.mxu0
      %v691 = vadd.f32 0.0, %v690
      %v692 = vpop.f32.mrf.mxu0
      %v693 = vpop.f32.mrf.mxu0
      %v694 = vpop.f32.mrf.mxu0
      %695 = vdwg.mxu0
      %v696 = vadd.f32 %v532, %v691
      %v697 = vmul.f32 %v696, %v568
      %v698 = vtanh.pop %v697
      %v699 = vmul.f32 %v698, 0.5
      %v700 = vadd.f32 %v699, 0.5
      %v701 = vsel %vm567, %v698, %v700
      %v702 = vmul.f32 %v701, %v642
      %704 = vrot.lane.b32.xlu0 %v701, 64
      %v705 = vpop.permute.xlu0 %704
      %v707 = vmul.f32 %v701, %v705
      %709 = vrot.lane.b32.xlu0 %v707, 32
      %v710 = vpop.permute.xlu0 %709
      %v712 = vadd.f32 %v702, %v710
      %v713 = vtanh.pop %v712
      %715 = vrot.lane.b32.xlu0 %v713, 64
      %v716 = vpop.permute.xlu0 %715
      %v718 = vmul.f32 %v701, %v716
      %v719 = vpack.c.bf16 %v718, %v718
      %721 = vrot.lane.b32.xlu0 %v719, 32
      %v722 = vpop.permute.xlu0 %721
      %v724 = vsel %vm582, %v722, 0
      %726 = vmatprep.subr.bf16.mxu0 0
      %727 = vmatpush1.bf16.msra.mxu0 0
      %728 = vmatprep.subr.bf16.mxu0 0
      %729 = vmatpush1.bf16.msra.mxu0 0
      %730 = vmatprep.subr.bf16.mxu0 0
      %731 = vmatpush1.bf16.msra.mxu0 0
      %732 = vmatprep.subr.bf16.mxu0 0
      %733 = vmatpush1.bf16.msra.mxu0 0
      %734 = vmatprep.subr.bf16.mxu0 0
      %735 = vmatpush1.bf16.msra.mxu0 0
      %736 = vmatprep.subr.bf16.mxu0 0
      %737 = vmatpush1.bf16.msra.mxu0 0
      %738 = vmatprep.subr.bf16.mxu0 0
      %739 = vmatpush1.bf16.msra.mxu0 %v579
      %740 = vmatprep.subr.bf16.mxu0 0
      %741 = vmatpush1.bf16.msra.mxu0 %v578
      %742 = vmatprep.subr.bf16.mxu0 0
      %743 = vmatpush2.bf16.msra.mxu0 0
      %744 = vmatprep.subr.bf16.mxu0 0
      %745 = vmatpush2.bf16.msra.mxu0 0
      %746 = vmatprep.subr.bf16.mxu0 0
      %747 = vmatpush2.bf16.msra.mxu0 0
      %748 = vmatprep.subr.bf16.mxu0 0
      %749 = vmatpush2.bf16.msra.mxu0 0
      %750 = vmatprep.subr.bf16.mxu0 0
      %751 = vmatpush2.bf16.msra.mxu0 0
      %752 = vmatprep.subr.bf16.mxu0 0
      %753 = vmatpush2.bf16.msra.mxu0 0
      %754 = vmatprep.subr.bf16.mxu0 0
      %755 = vmatpush2.bf16.msra.mxu0 0
      %756 = vmatprep.subr.bf16.mxu0 0
      %757 = vmatpush2.bf16.msra.mxu0 0
      %758 = vmatprep.mubr.bf16.mxu0 0
      %759 = vmatmul.mubr.bf16.gmra.mxu0 %v724
      %v760 = vpop.f32.mrf.mxu0
      %v761 = vadd.f32 0.0, %v760
      %v762 = vpop.f32.mrf.mxu0
      %v763 = vpop.f32.mrf.mxu0
      %v764 = vpop.f32.mrf.mxu0
      %765 = vdwg.mxu0
      %v766 = vadd.f32 %v537, %v761
      %v767 = vmul.f32 %v766, %v568
      %v768 = vtanh.pop %v767
      %v769 = vmul.f32 %v768, 0.5
      %v770 = vadd.f32 %v769, 0.5
      %v771 = vsel %vm567, %v768, %v770
      %v772 = vmul.f32 %v771, %v712
      %774 = vrot.lane.b32.xlu0 %v771, 64
      %v775 = vpop.permute.xlu0 %774
      %v777 = vmul.f32 %v771, %v775
      %779 = vrot.lane.b32.xlu0 %v777, 32
      %v780 = vpop.permute.xlu0 %779
      %v782 = vadd.f32 %v772, %v780
      %v783 = vtanh.pop %v782
      %785 = vrot.lane.b32.xlu0 %v783, 64
      %v786 = vpop.permute.xlu0 %785
      %v788 = vmul.f32 %v771, %v786
      %v789 = vpack.c.bf16 %v788, %v788
      %791 = vrot.lane.b32.xlu0 %v789, 32
      %v792 = vpop.permute.xlu0 %791
      %v794 = vsel %vm582, %v792, 0
      %796 = vmatprep.subr.bf16.mxu0 0
      %797 = vmatpush1.bf16.msra.mxu0 0
      %798 = vmatprep.subr.bf16.mxu0 0
      %799 = vmatpush1.bf16.msra.mxu0 0
      %800 = vmatprep.subr.bf16.mxu0 0
      %801 = vmatpush1.bf16.msra.mxu0 0
      %802 = vmatprep.subr.bf16.mxu0 0
      %803 = vmatpush1.bf16.msra.mxu0 0
      %804 = vmatprep.subr.bf16.mxu0 0
      %805 = vmatpush1.bf16.msra.mxu0 0
      %806 = vmatprep.subr.bf16.mxu0 0
      %807 = vmatpush1.bf16.msra.mxu0 0
      %808 = vmatprep.subr.bf16.mxu0 0
      %809 = vmatpush1.bf16.msra.mxu0 %v579
      %810 = vmatprep.subr.bf16.mxu0 0
      %811 = vmatpush1.bf16.msra.mxu0 %v578
      %812 = vmatprep.subr.bf16.mxu0 0
      %813 = vmatpush2.bf16.msra.mxu0 0
      %814 = vmatprep.subr.bf16.mxu0 0
      %815 = vmatpush2.bf16.msra.mxu0 0
      %816 = vmatprep.subr.bf16.mxu0 0
      %817 = vmatpush2.bf16.msra.mxu0 0
      %818 = vmatprep.subr.bf16.mxu0 0
      %819 = vmatpush2.bf16.msra.mxu0 0
      %820 = vmatprep.subr.bf16.mxu0 0
      %821 = vmatpush2.bf16.msra.mxu0 0
      %822 = vmatprep.subr.bf16.mxu0 0
      %823 = vmatpush2.bf16.msra.mxu0 0
      %824 = vmatprep.subr.bf16.mxu0 0
      %825 = vmatpush2.bf16.msra.mxu0 0
      %826 = vmatprep.subr.bf16.mxu0 0
      %827 = vmatpush2.bf16.msra.mxu0 0
      %828 = vmatprep.mubr.bf16.mxu0 0
      %829 = vmatmul.mubr.bf16.gmra.mxu0 %v794
      %v830 = vpop.f32.mrf.mxu0
      %v831 = vadd.f32 0.0, %v830
      %v832 = vpop.f32.mrf.mxu0
      %v833 = vpop.f32.mrf.mxu0
      %v834 = vpop.f32.mrf.mxu0
      %835 = vdwg.mxu0
      %v836 = vadd.f32 %v540, %v831
      %v837 = vmul.f32 %v836, %v568
      %v838 = vtanh.pop %v837
      %v839 = vmul.f32 %v838, 0.5
      %v840 = vadd.f32 %v839, 0.5
      %v841 = vsel %vm567, %v838, %v840
      %v842 = vmul.f32 %v841, %v782
      %844 = vrot.lane.b32.xlu0 %v841, 64
      %v845 = vpop.permute.xlu0 %844
      %v847 = vmul.f32 %v841, %v845
      %849 = vrot.lane.b32.xlu0 %v847, 32
      %v850 = vpop.permute.xlu0 %849
      %v852 = vadd.f32 %v842, %v850
      %v853 = vtanh.pop %v852
      %855 = vrot.lane.b32.xlu0 %v853, 64
      %v856 = vpop.permute.xlu0 %855
      %v858 = vmul.f32 %v841, %v856
      %v859 = vpack.c.bf16 %v858, %v858
      %861 = vrot.lane.b32.xlu0 %v859, 32
      %v862 = vpop.permute.xlu0 %861
      %v864 = vsel %vm582, %v862, 0
      %866 = vmatprep.subr.bf16.mxu0 0
      %867 = vmatpush1.bf16.msra.mxu0 0
      %868 = vmatprep.subr.bf16.mxu0 0
      %869 = vmatpush1.bf16.msra.mxu0 0
      %870 = vmatprep.subr.bf16.mxu0 0
      %871 = vmatpush1.bf16.msra.mxu0 0
      %872 = vmatprep.subr.bf16.mxu0 0
      %873 = vmatpush1.bf16.msra.mxu0 0
      %874 = vmatprep.subr.bf16.mxu0 0
      %875 = vmatpush1.bf16.msra.mxu0 0
      %876 = vmatprep.subr.bf16.mxu0 0
      %877 = vmatpush1.bf16.msra.mxu0 0
      %878 = vmatprep.subr.bf16.mxu0 0
      %879 = vmatpush1.bf16.msra.mxu0 %v579
      %880 = vmatprep.subr.bf16.mxu0 0
      %881 = vmatpush1.bf16.msra.mxu0 %v578
      %882 = vmatprep.subr.bf16.mxu0 0
      %883 = vmatpush2.bf16.msra.mxu0 0
      %884 = vmatprep.subr.bf16.mxu0 0
      %885 = vmatpush2.bf16.msra.mxu0 0
      %886 = vmatprep.subr.bf16.mxu0 0
      %887 = vmatpush2.bf16.msra.mxu0 0
      %888 = vmatprep.subr.bf16.mxu0 0
      %889 = vmatpush2.bf16.msra.mxu0 0
      %890 = vmatprep.subr.bf16.mxu0 0
      %891 = vmatpush2.bf16.msra.mxu0 0
      %892 = vmatprep.subr.bf16.mxu0 0
      %893 = vmatpush2.bf16.msra.mxu0 0
      %894 = vmatprep.subr.bf16.mxu0 0
      %895 = vmatpush2.bf16.msra.mxu0 0
      %896 = vmatprep.subr.bf16.mxu0 0
      %897 = vmatpush2.bf16.msra.mxu0 0
      %898 = vmatprep.mubr.bf16.mxu0 0
      %899 = vmatmul.mubr.bf16.gmra.mxu0 %v864
      %v900 = vpop.f32.mrf.mxu0
      %v901 = vadd.f32 0.0, %v900
      %v902 = vpop.f32.mrf.mxu0
      %v903 = vpop.f32.mrf.mxu0
      %v904 = vpop.f32.mrf.mxu0
      %905 = vdwg.mxu0
      %v906 = vadd.f32 %v545, %v901
      %v907 = vmul.f32 %v906, %v568
      %v908 = vtanh.pop %v907
      %v909 = vmul.f32 %v908, 0.5
      %v910 = vadd.f32 %v909, 0.5
      %v911 = vsel %vm567, %v908, %v910
      %v912 = vmul.f32 %v911, %v852
      %914 = vrot.lane.b32.xlu0 %v911, 64
      %v915 = vpop.permute.xlu0 %914
      %v917 = vmul.f32 %v911, %v915
      %919 = vrot.lane.b32.xlu0 %v917, 32
      %v920 = vpop.permute.xlu0 %919
      %v922 = vadd.f32 %v912, %v920
      %v923 = vtanh.pop %v922
      %925 = vrot.lane.b32.xlu0 %v923, 64
      %v926 = vpop.permute.xlu0 %925
      %v928 = vmul.f32 %v911, %v926
      %v929 = vpack.c.bf16 %v928, %v928
      %931 = vrot.lane.b32.xlu0 %v929, 32
      %v932 = vpop.permute.xlu0 %931
      %v934 = vsel %vm582, %v932, 0
      %936 = vmatprep.subr.bf16.mxu0 0
      %937 = vmatpush1.bf16.msra.mxu0 0
      %938 = vmatprep.subr.bf16.mxu0 0
      %939 = vmatpush1.bf16.msra.mxu0 0
      %940 = vmatprep.subr.bf16.mxu0 0
      %941 = vmatpush1.bf16.msra.mxu0 0
      %942 = vmatprep.subr.bf16.mxu0 0
      %943 = vmatpush1.bf16.msra.mxu0 0
      %944 = vmatprep.subr.bf16.mxu0 0
      %945 = vmatpush1.bf16.msra.mxu0 0
      %946 = vmatprep.subr.bf16.mxu0 0
      %947 = vmatpush1.bf16.msra.mxu0 0
      %948 = vmatprep.subr.bf16.mxu0 0
      %949 = vmatpush1.bf16.msra.mxu0 %v579
      %950 = vmatprep.subr.bf16.mxu0 0
      %951 = vmatpush1.bf16.msra.mxu0 %v578
      %952 = vmatprep.subr.bf16.mxu0 0
      %953 = vmatpush2.bf16.msra.mxu0 0
      %954 = vmatprep.subr.bf16.mxu0 0
      %955 = vmatpush2.bf16.msra.mxu0 0
      %956 = vmatprep.subr.bf16.mxu0 0
      %957 = vmatpush2.bf16.msra.mxu0 0
      %958 = vmatprep.subr.bf16.mxu0 0
      %959 = vmatpush2.bf16.msra.mxu0 0
      %960 = vmatprep.subr.bf16.mxu0 0
      %961 = vmatpush2.bf16.msra.mxu0 0
      %962 = vmatprep.subr.bf16.mxu0 0
      %963 = vmatpush2.bf16.msra.mxu0 0
      %964 = vmatprep.subr.bf16.mxu0 0
      %965 = vmatpush2.bf16.msra.mxu0 0
      %966 = vmatprep.subr.bf16.mxu0 0
      %967 = vmatpush2.bf16.msra.mxu0 0
      %968 = vmatprep.mubr.bf16.mxu0 0
      %969 = vmatmul.mubr.bf16.gmra.mxu0 %v934
      %v970 = vpop.f32.mrf.mxu0
      %v971 = vadd.f32 0.0, %v970
      %v972 = vpop.f32.mrf.mxu0
      %v973 = vpop.f32.mrf.mxu0
      %v974 = vpop.f32.mrf.mxu0
      %975 = vdwg.mxu0
      %v976 = vadd.f32 %v548, %v971
      %v977 = vmul.f32 %v976, %v568
      %v978 = vtanh.pop %v977
      %v979 = vmul.f32 %v978, 0.5
      %v980 = vadd.f32 %v979, 0.5
      %v981 = vsel %vm567, %v978, %v980
      %v982 = vmul.f32 %v981, %v922
      %984 = vrot.lane.b32.xlu0 %v981, 64
      %v985 = vpop.permute.xlu0 %984
      %v987 = vmul.f32 %v981, %v985
      %989 = vrot.lane.b32.xlu0 %v987, 32
      %v990 = vpop.permute.xlu0 %989
      %v992 = vadd.f32 %v982, %v990
      %v993 = vtanh.pop %v992
      %995 = vrot.lane.b32.xlu0 %v993, 64
      %v996 = vpop.permute.xlu0 %995
      %v998 = vmul.f32 %v981, %v996
      %v999 = vpack.c.bf16 %v998, %v998
      %1001 = vrot.lane.b32.xlu0 %v999, 32
      %v1002 = vpop.permute.xlu0 %1001
      %v1004 = vsel %vm582, %v1002, 0
      %1006 = vmatprep.subr.bf16.mxu0 0
      %1007 = vmatpush1.bf16.msra.mxu0 0
      %1008 = vmatprep.subr.bf16.mxu0 0
      %1009 = vmatpush1.bf16.msra.mxu0 0
      %1010 = vmatprep.subr.bf16.mxu0 0
      %1011 = vmatpush1.bf16.msra.mxu0 0
      %1012 = vmatprep.subr.bf16.mxu0 0
      %1013 = vmatpush1.bf16.msra.mxu0 0
      %1014 = vmatprep.subr.bf16.mxu0 0
      %1015 = vmatpush1.bf16.msra.mxu0 0
      %1016 = vmatprep.subr.bf16.mxu0 0
      %1017 = vmatpush1.bf16.msra.mxu0 0
      %1018 = vmatprep.subr.bf16.mxu0 0
      %1019 = vmatpush1.bf16.msra.mxu0 %v579
      %1020 = vmatprep.subr.bf16.mxu0 0
      %1021 = vmatpush1.bf16.msra.mxu0 %v578
      %1022 = vmatprep.subr.bf16.mxu0 0
      %1023 = vmatpush2.bf16.msra.mxu0 0
      %1024 = vmatprep.subr.bf16.mxu0 0
      %1025 = vmatpush2.bf16.msra.mxu0 0
      %1026 = vmatprep.subr.bf16.mxu0 0
      %1027 = vmatpush2.bf16.msra.mxu0 0
      %1028 = vmatprep.subr.bf16.mxu0 0
      %1029 = vmatpush2.bf16.msra.mxu0 0
      %1030 = vmatprep.subr.bf16.mxu0 0
      %1031 = vmatpush2.bf16.msra.mxu0 0
      %1032 = vmatprep.subr.bf16.mxu0 0
      %1033 = vmatpush2.bf16.msra.mxu0 0
      %1034 = vmatprep.subr.bf16.mxu0 0
      %1035 = vmatpush2.bf16.msra.mxu0 0
      %1036 = vmatprep.subr.bf16.mxu0 0
      %1037 = vmatpush2.bf16.msra.mxu0 0
      %1038 = vmatprep.mubr.bf16.mxu0 0
      %1039 = vmatmul.mubr.bf16.gmra.mxu0 %v1004
      %v1040 = vpop.f32.mrf.mxu0
      %v1041 = vadd.f32 0.0, %v1040
      %v1042 = vpop.f32.mrf.mxu0
      %v1043 = vpop.f32.mrf.mxu0
      %v1044 = vpop.f32.mrf.mxu0
      %1045 = vdwg.mxu0
      %v1046 = vadd.f32 %v553, %v1041
      %v1047 = vmul.f32 %v1046, %v568
      %v1048 = vtanh.pop %v1047
      %v1049 = vmul.f32 %v1048, 0.5
      %v1050 = vadd.f32 %v1049, 0.5
      %v1051 = vsel %vm567, %v1048, %v1050
      %v1052 = vmul.f32 %v1051, %v992
      %1054 = vrot.lane.b32.xlu0 %v1051, 64
      %v1055 = vpop.permute.xlu0 %1054
      %v1057 = vmul.f32 %v1051, %v1055
      %1059 = vrot.lane.b32.xlu0 %v1057, 32
      %v1060 = vpop.permute.xlu0 %1059
      %v1062 = vadd.f32 %v1052, %v1060
      %v1063 = vtanh.pop %v1062
      %1065 = vrot.lane.b32.xlu0 %v1063, 64
      %v1066 = vpop.permute.xlu0 %1065
      %v1068 = vmul.f32 %v1051, %v1066
      %v1069 = vpack.c.bf16 %v1068, %v1068
      %1071 = vrot.lane.b32.xlu0 %v1069, 32
      %v1072 = vpop.permute.xlu0 %1071
      %v1074 = vsel %vm582, %v1072, 0
      %1076 = vmatprep.subr.bf16.mxu0 0
      %1077 = vmatpush1.bf16.msra.mxu0 0
      %1078 = vmatprep.subr.bf16.mxu0 0
      %1079 = vmatpush1.bf16.msra.mxu0 0
      %1080 = vmatprep.subr.bf16.mxu0 0
      %1081 = vmatpush1.bf16.msra.mxu0 0
      %1082 = vmatprep.subr.bf16.mxu0 0
      %1083 = vmatpush1.bf16.msra.mxu0 0
      %1084 = vmatprep.subr.bf16.mxu0 0
      %1085 = vmatpush1.bf16.msra.mxu0 0
      %1086 = vmatprep.subr.bf16.mxu0 0
      %1087 = vmatpush1.bf16.msra.mxu0 0
      %1088 = vmatprep.subr.bf16.mxu0 0
      %1089 = vmatpush1.bf16.msra.mxu0 %v579
      %1090 = vmatprep.subr.bf16.mxu0 0
      %1091 = vmatpush1.bf16.msra.mxu0 %v578
      %1092 = vmatprep.subr.bf16.mxu0 0
      %1093 = vmatpush2.bf16.msra.mxu0 0
      %1094 = vmatprep.subr.bf16.mxu0 0
      %1095 = vmatpush2.bf16.msra.mxu0 0
      %1096 = vmatprep.subr.bf16.mxu0 0
      %1097 = vmatpush2.bf16.msra.mxu0 0
      %1098 = vmatprep.subr.bf16.mxu0 0
      %1099 = vmatpush2.bf16.msra.mxu0 0
      %1100 = vmatprep.subr.bf16.mxu0 0
      %1101 = vmatpush2.bf16.msra.mxu0 0
      %1102 = vmatprep.subr.bf16.mxu0 0
      %1103 = vmatpush2.bf16.msra.mxu0 0
      %1104 = vmatprep.subr.bf16.mxu0 0
      %1105 = vmatpush2.bf16.msra.mxu0 0
      %1106 = vmatprep.subr.bf16.mxu0 0
      %1107 = vmatpush2.bf16.msra.mxu0 0
      %1108 = vmatprep.mubr.bf16.mxu0 0
      %1109 = vmatmul.mubr.bf16.gmra.mxu0 %v1074
      %v1110 = vpop.f32.mrf.mxu0
      %v1111 = vadd.f32 0.0, %v1110
      %v1112 = vpop.f32.mrf.mxu0
      %v1113 = vpop.f32.mrf.mxu0
      %v1114 = vpop.f32.mrf.mxu0
      %1115 = vdwg.mxu0
      %v1116 = vadd.f32 %v556, %v1111
      %v1117 = vmul.f32 %v1116, %v568
      %v1118 = vtanh.pop %v1117
      %v1119 = vmul.f32 %v1118, 0.5
      %v1120 = vadd.f32 %v1119, 0.5
      %v1121 = vsel %vm567, %v1118, %v1120
      %v1122 = vmul.f32 %v1121, %v1062
      %1124 = vrot.lane.b32.xlu0 %v1121, 64
      %v1125 = vpop.permute.xlu0 %1124
      %v1127 = vmul.f32 %v1121, %v1125
      %1129 = vrot.lane.b32.xlu0 %v1127, 32
      %v1130 = vpop.permute.xlu0 %1129
      %v1132 = vadd.f32 %v1122, %v1130
      %v1133 = vtanh.pop %v1132
      %1135 = vrot.lane.b32.xlu0 %v1133, 64
      %v1136 = vpop.permute.xlu0 %1135
      %v1138 = vmul.f32 %v1121, %v1136
      %v1139 = vld [vmem:[%s7] sm:$0xff]
      %v1140 = vld [vmem:[%s7 + $0x8] sm:$0xff]
      %v1141 = vld [vmem:[%s7 + $0x10] sm:$0xff]
      %v1142 = vld [vmem:[%s7 + $0x18] sm:$0xff]
      %v1143 = vld [vmem:[#allocation2] sm:$0x1]
      %v1145 = vlaneseq
      %v1146 = vshrl.u32 %v1145, 7
      %v1147 = vsub.s32 0, %v1146
      %v1148 = vrot.slane %v1143, %v1147
      %1151 = vrot.lane.b32.xlu0 %v1138, 32
      %v1152 = vpop.permute.xlu0 %1151
      %v1153 = vsel %vm582, %v1152, 0
      %1155 = vmatprep.subr.mxu0 0.0
      %1156 = vmatpush1.msra.mxu0 0.0
      %1157 = vmatprep.subr.mxu0 0.0
      %1158 = vmatpush1.msra.mxu0 0.0
      %1159 = vmatprep.subr.mxu0 0.0
      %1160 = vmatpush1.msra.mxu0 0.0
      %1161 = vmatprep.subr.mxu0 0.0
      %1162 = vmatpush1.msra.mxu0 0.0
      %1163 = vmatprep.subr.mxu0 0.0
      %1164 = vmatpush1.msra.mxu0 0.0
      %1165 = vmatprep.subr.mxu0 0.0
      %1166 = vmatpush1.msra.mxu0 0.0
      %1167 = vmatprep.subr.mxu0 0.0
      %1168 = vmatpush1.msra.mxu0 0.0
      %1169 = vmatprep.subr.mxu0 0.0
      %1170 = vmatpush1.msra.mxu0 0.0
      %1171 = vmatprep.subr.mxu0 0.0
      %1172 = vmatpush1.msra.mxu0 0.0
      %1173 = vmatprep.subr.mxu0 0.0
      %1174 = vmatpush1.msra.mxu0 0.0
      %1175 = vmatprep.subr.mxu0 0.0
      %1176 = vmatpush1.msra.mxu0 0.0
      %1177 = vmatprep.subr.mxu0 0.0
      %1178 = vmatpush1.msra.mxu0 0.0
      %1179 = vmatprep.subr.mxu0 0.0
      %1180 = vmatpush1.msra.mxu0 %v1142
      %1181 = vmatprep.subr.mxu0 0.0
      %1182 = vmatpush1.msra.mxu0 %v1141
      %1183 = vmatprep.subr.mxu0 0.0
      %1184 = vmatpush1.msra.mxu0 %v1140
      %1185 = vmatprep.subr.mxu0 0.0
      %1186 = vmatpush1.msra.mxu0 %v1139
      %1187 = vmatprep.subr.mxu0 0.0
      %1188 = vmatpush2.msra.mxu0 0.0
      %1189 = vmatprep.subr.mxu0 0.0
      %1190 = vmatpush2.msra.mxu0 0.0
      %1191 = vmatprep.subr.mxu0 0.0
      %1192 = vmatpush2.msra.mxu0 0.0
      %1193 = vmatprep.subr.mxu0 0.0
      %1194 = vmatpush2.msra.mxu0 0.0
      %1195 = vmatprep.subr.mxu0 0.0
      %1196 = vmatpush2.msra.mxu0 0.0
      %1197 = vmatprep.subr.mxu0 0.0
      %1198 = vmatpush2.msra.mxu0 0.0
      %1199 = vmatprep.subr.mxu0 0.0
      %1200 = vmatpush2.msra.mxu0 0.0
      %1201 = vmatprep.subr.mxu0 0.0
      %1202 = vmatpush2.msra.mxu0 0.0
      %1203 = vmatprep.subr.mxu0 0.0
      %1204 = vmatpush2.msra.mxu0 0.0
      %1205 = vmatprep.subr.mxu0 0.0
      %1206 = vmatpush2.msra.mxu0 0.0
      %1207 = vmatprep.subr.mxu0 0.0
      %1208 = vmatpush2.msra.mxu0 0.0
      %1209 = vmatprep.subr.mxu0 0.0
      %1210 = vmatpush2.msra.mxu0 0.0
      %1211 = vmatprep.subr.mxu0 0.0
      %1212 = vmatpush2.msra.mxu0 0.0
      %1213 = vmatprep.subr.mxu0 0.0
      %1214 = vmatpush2.msra.mxu0 0.0
      %1215 = vmatprep.subr.mxu0 0.0
      %1216 = vmatpush2.msra.mxu0 0.0
      %1217 = vmatprep.subr.mxu0 0.0
      %1218 = vmatpush2.msra.mxu0 0.0
      %1219 = vmatprep.mubr.f32.mxu0 0.0
      %1220 = vmatmul.mubr.f32.gmra.mxu0 %v1153
      %v1221 = vpop.f32.mrf.mxu0
      %v1222 = vadd.f32 %v1148, %v1221
      %v1223 = vpop.f32.mrf.mxu0
      %1224 = vdwg.mxu0
      %v1225 = vmul.f32 %v1222, 0.5
      %v1226 = vtanh.pop %v1225
      %v1227 = vmul.f32 %v1226, 0.5
      %v1228 = vadd.f32 %v1227, 0.5
      %vm1229 = vcmask 7168
      %1230 = vst.msk [vmem:[%s349] sm:$0xff] %vm1229, %v1228
      %p1231 = scmp.lt.s32.totalorder %s22, 1
      %s1232 = scalar_select %p1231, %s22, 1
      %s1233 = smul.addr %s1232, 8
      %s1234 = scalar_lea.vmem %s9, %s1233
      // Predicated region
      $region57: #{predictor_lstm_forward.1} parent=55 // pred_check
        %p1235 = pneg %p239
      $region58: #{predictor_lstm_forward.1} parent=55 // pred_check_branch
        %1237 = sbr.rel (%p1235) target = $region60
      $region59: #{predictor_lstm_forward.1} parent=55 // pred_region
        _
      $region60: #{predictor_lstm_forward.1} parent=55 // pred_fallthru
        _
    $region56: #{predictor_lstm_forward.1} parent=5 // pred_fallthru
      _
    %p1238 = scmp.le.s32.totalorder 2, %s17
    // Predicated region
    $region61: #{predictor_lstm_forward.1} parent=5 // pred_check
      %p1239 = pneg %p1238
    $region62: #{predictor_lstm_forward.1} parent=5 // pred_check_branch
      %1241 = sbr.rel (%p1239) target = $region64
    $region63: #{predictor_lstm_forward.1} parent=5 // pred_region
      %s1242 = ssub.s32 %s17, 2
      // Predicated region
      $region65: #{predictor_lstm_forward.1} parent=63 // pred_check
        %p1243 = pneg %p245
      $region66: #{predictor_lstm_forward.1} parent=63 // pred_check_branch
        %1245 = sbr.rel (%p1243) target = $region68
      $region67: #{predictor_lstm_forward.1} parent=63 // pred_region
        %p1246 = scmp.lt.s32.totalorder %s23, 1
        %s1247 = scalar_select %p1246, %s23, 1
        %s1248 = smul.addr %s1247, 8
        %s1249 = scalar_lea.vmem %s9, %s1248
      $region68: #{predictor_lstm_forward.1} parent=63 // pred_fallthru
        _
    $region64: #{predictor_lstm_forward.1} parent=5 // pred_fallthru
      _
  $region6: #{predictor_lstm_forward.1} parent=0 // loop_footer
    %s21 = sadd.s32 1, %s17
  $region7: #{predictor_lstm_forward.1} parent=0 // loop_footer_branch
    %16 = sbr.rel target = $region3
  $region8: #{predictor_lstm_forward.1} parent=0 // loop_exit
    _

</llo_original>
